<compile_context>
chip_gen: v6e
topology: v6e:2x2x1
jax: 0.10.0
libtpu: 0.0.40
codegen_flags: <defaults>
</compile_context>

<pallas_src>
import functools

import jax
import jax.numpy as jnp
from jax.experimental import pallas as pl
from jax.experimental.pallas import tpu as pltpu


# ---------------------------------------------------------------------------
# Kernel 1: unscaled multi-head attention, one batch element per grid step.
# ---------------------------------------------------------------------------
def _attn_kernel(x_ref, mask_ref, wqkv_ref, bqkv_ref, wo_ref, bo_ref, o_ref, *, heads):
    # x_ref:    (1, S, D) f32        mask_ref: (1, S, 1) f32 (1=keep, 0=mask query row)
    # wqkv_ref: (D, 3D) bf16 [Wq|Wk|Wv] (stored (in,out) == torch weight.T), bqkv_ref: (1, 3D) f32
    # wo_ref:   (D, D) bf16          bo_ref:   (1, D) f32
    # o_ref:    (1, S, D) bf16
    S, D = x_ref.shape[1], x_ref.shape[2]
    dk = D // heads
    f32, bf16 = jnp.float32, jnp.bfloat16

    xb = x_ref[0].astype(bf16)                                   # (S, D)
    # Fused QKV projection: one wide MXU push (N = 3D).
    qkv = jnp.dot(xb, wqkv_ref[...], preferred_element_type=f32) + bqkv_ref[...]
    m = mask_ref[0]                                              # (S, 1)

    # Query-row masking hoisted out of the head loop: zeroing a masked query row makes all
    # its scores 0 -> uniform softmax, identical to masked_fill(mask==0, -1e9) + softmax.
    q = qkv[:, 0:D] * m
    k = qkv[:, D:2 * D]
    v = qkv[:, 2 * D:3 * D]

    ctx_parts = []
    for h in range(heads):                                       # static unroll over heads
        sl = slice(h * dk, (h + 1) * dk)
        qh = q[:, sl].astype(bf16)
        kh = k[:, sl].astype(bf16)
        vh = v[:, sl].astype(bf16)
        # unscaled scores: q @ k^T (NT dot, contraction over d_k)
        s = jax.lax.dot_general(qh, kh, (((1,), (1,)), ((), ())),
                                preferred_element_type=f32)      # (S, S)
        s = s - jnp.max(s, axis=-1, keepdims=True)
        p = jnp.exp(s)
        denom = jnp.sum(p, axis=-1, keepdims=True)               # (S, 1)
        # dropout on attention probs == identity (eval mode)
        ctx = jnp.dot(p.astype(bf16), vh, preferred_element_type=f32)   # (S, dk) un-normalized
        # deferred softmax normalization: (S,dk) scale + EUP reciprocal instead of (S,S) divide
        ctx_parts.append(ctx * pl.reciprocal(denom, approx=True))
    # Concatenate per-head contexts -> single full-K (K=D) output projection.
    concat = jnp.concatenate(ctx_parts, axis=-1).astype(bf16)    # (S, D)
    out = jnp.dot(concat, wo_ref[...], preferred_element_type=f32) + bo_ref[...]
    o_ref[0] = out.astype(o_ref.dtype)


# ---------------------------------------------------------------------------
# Kernel 2: fused row-wise tail — residual + norm_1 + highway_att + FFN +
#           residual + norm_2 + highway_ff.  Weight-stationary, row-tiled.
# ---------------------------------------------------------------------------
def _row_kernel(x_ref, attn_ref, ln_ref, hwa_w_ref, hwa_b_ref,
                w1_ref, b1_ref, w2_ref, b2_ref, hwf_w_ref, hwf_b_ref,
                o_ref, *, eps, dff_chunk):
    # x_ref/o_ref: (tm, D) f32     attn_ref: (tm, D) bf16
    # ln_ref:   (2, 2, 1, D) f32   [norm1|norm2, alpha|bias]
    # hw*_w:    (2, D, 3D) bf16    [layer, in, gate|non_linear|linear fused on the out dim]
    # hw*_b:    (2, 1, 3D) f32
    # w1: (D, d_ff) bf16  b1: (1, d_ff) f32   w2: (d_ff, D) bf16  b2: (1, D) f32
    f32, bf16 = jnp.float32, jnp.bfloat16
    D = x_ref.shape[1]

    def mmb(a, w):  # bf16 MXU operands, f32 accumulation
        return jnp.dot(a.astype(bf16), w, preferred_element_type=f32)

    def torch_norm(y, alpha, bias):
        mu = jnp.mean(y, axis=-1, keepdims=True)
        c = y - mu
        var = jnp.sum(c * c, axis=-1, keepdims=True) / (D - 1)     # torch std: unbiased (N-1)
        inv = pl.reciprocal(jnp.sqrt(var) + eps, approx=True)      # divide -> EUP
        return alpha * c * inv + bias

    def highway(y, w_ref, b_ref):
        for l in range(2):                                         # static unroll
            # Fused gate|non_linear|linear projection: one (tm,D)@(D,3D) matmul.
            z = mmb(y, w_ref[l]) + b_ref[l]                        # (tm, 3D)
            g = pl.reciprocal(1.0 + jnp.exp(-z[:, 0:D]), approx=True)   # sigmoid via EUP
            nl = jnp.maximum(z[:, D:2 * D], 0.0)
            lin = z[:, 2 * D:3 * D]
            y = lin + g * (nl - lin)                               # == g*nl + (1-g)*lin
        return y

    # x + dropout(attn)  — dropout == identity (eval mode)
    y = x_ref[...] + attn_ref[...].astype(f32)
    y = torch_norm(y, ln_ref[0, 0], ln_ref[0, 1])
    y = highway(y, hwa_w_ref, hwa_b_ref)

    # FeedForward: linear_2(dropout(relu(linear_1(y)))), dropout == identity.
    # d_ff is chunked so the f32 intermediate stays (tm, dff_chunk).
    d_ff = w1_ref.shape[1]
    yb = y.astype(bf16)
    f = jnp.zeros((y.shape[0], D), f32)
    for c0 in range(0, d_ff, dff_chunk):                           # static unroll
        c1 = c0 + dff_chunk
        h = jnp.maximum(jnp.dot(yb, w1_ref[:, c0:c1], preferred_element_type=f32)
                        + b1_ref[:, c0:c1], 0.0)
        f = f + jnp.dot(h.astype(bf16), w2_ref[c0:c1, :], preferred_element_type=f32)
    f = f + b2_ref[...]

    y = y + f
    y = torch_norm(y, ln_ref[1, 0], ln_ref[1, 1])
    y = highway(y, hwf_w_ref, hwf_b_ref)
    o_ref[...] = y.astype(o_ref.dtype)


# ---------------------------------------------------------------------------
# Wrapper
# ---------------------------------------------------------------------------
def _default_vmem_limit_bytes():
    # ~3/4 of physical VMEM: ~96 MiB on v5e/v6e (128 MiB), ~48 MiB on v7x (64 MiB/TC).
    try:
        cap = int(pltpu.get_tpu_info().vmem_capacity_bytes)
    except Exception:
        cap = 128 * 1024 * 1024
    return max(32 * 1024 * 1024, (cap * 3) // 4)


def encoder_layer_unscaled_highway(x, mask, params, *, heads, tm=512, dff_chunk=1024,
                                   eps=1e-6, vmem_limit_bytes=None):
    """x: (B, S, D) f32, mask: (B, S) {0,1} -> (B, S, D) f32."""
    B, S, D = x.shape
    assert D % heads == 0
    d_ff = params["ff_w1"].shape[1]
    if dff_chunk <= 0 or dff_chunk > d_ff or (d_ff % dff_chunk) != 0:
        dff_chunk = d_ff
    if vmem_limit_bytes is None:
        vmem_limit_bytes = _default_vmem_limit_bytes()
    mask3 = mask.astype(jnp.float32).reshape(B, S, 1)

    cparams = pltpu.CompilerParams(dimension_semantics=("parallel",),
                                   vmem_limit_bytes=vmem_limit_bytes)

    # ---- attention (grid over batch) ----
    attn_cost = pl.CostEstimate(
        flops=B * (8 * S * D * D + 4 * S * S * D),
        transcendentals=B * heads * S * (S + 1),
        bytes_accessed=B * S * D * 4 + B * S * D * 2 + B * S * 4
                       + 4 * D * D * 2 + 4 * D * 4)
    attn_out = pl.pallas_call(
        functools.partial(_attn_kernel, heads=heads),
        out_shape=jax.ShapeDtypeStruct((B, S, D), jnp.bfloat16),
        grid_spec=pltpu.PrefetchScalarGridSpec(
            num_scalar_prefetch=0,
            grid=(B,),
            in_specs=[
                pl.BlockSpec((1, S, D), lambda b: (b, 0, 0)),     # x
                pl.BlockSpec((1, S, 1), lambda b: (b, 0, 0)),     # mask
                pl.BlockSpec((D, 3 * D), lambda b: (0, 0)),       # Wq|Wk|Wv fused (bf16)
                pl.BlockSpec((1, 3 * D), lambda b: (0, 0)),       # qkv bias (f32)
                pl.BlockSpec((D, D), lambda b: (0, 0)),           # Wo (bf16)
                pl.BlockSpec((1, D), lambda b: (0, 0)),           # out bias (f32)
            ],
            out_specs=pl.BlockSpec((1, S, D), lambda b: (b, 0, 0)),
        ),
        compiler_params=cparams,
        cost_estimate=attn_cost,
    )(x, mask3, params["attn_qkv_w"], params["attn_qkv_b"],
      params["attn_out_w"], params["attn_out_b"])

    # ---- fused row-wise tail (grid over token-row tiles) ----
    M = B * S
    tm = min(tm, M)                              # clamp for small problems
    Mp = ((M + tm - 1) // tm) * tm               # pad ragged tails with zero rows
    x2d = x.reshape(M, D)
    a2d = attn_out.reshape(M, D)
    if Mp != M:
        x2d = jnp.pad(x2d, ((0, Mp - M), (0, 0)))
        a2d = jnp.pad(a2d, ((0, Mp - M), (0, 0)))

    row_cost = pl.CostEstimate(
        flops=Mp * (24 * D * D + 4 * D * d_ff),
        transcendentals=Mp * (4 * D + 2),
        bytes_accessed=2 * Mp * D * 4 + Mp * D * 2
                       + (12 * D * D + 2 * D * d_ff) * 2 + (17 * D + d_ff) * 4)
    out2d = pl.pallas_call(
        functools.partial(_row_kernel, eps=eps, dff_chunk=dff_chunk),
        out_shape=jax.ShapeDtypeStruct((Mp, D), jnp.float32),
        grid_spec=pltpu.PrefetchScalarGridSpec(
            num_scalar_prefetch=0,
            grid=(Mp // tm,),
            in_specs=[
                pl.BlockSpec((tm, D), lambda i: (i, 0)),              # x rows (f32)
                pl.BlockSpec((tm, D), lambda i: (i, 0)),              # attn rows (bf16)
                pl.BlockSpec((2, 2, 1, D), lambda i: (0, 0, 0, 0)),   # norm1/norm2 alpha,bias
                pl.BlockSpec((2, D, 3 * D), lambda i: (0, 0, 0)),     # highway_att W fused (bf16)
                pl.BlockSpec((2, 1, 3 * D), lambda i: (0, 0, 0)),     # highway_att b
                pl.BlockSpec((D, d_ff), lambda i: (0, 0)),            # ff W1 (bf16)
                pl.BlockSpec((1, d_ff), lambda i: (0, 0)),            # ff b1
                pl.BlockSpec((d_ff, D), lambda i: (0, 0)),            # ff W2 (bf16)
                pl.BlockSpec((1, D), lambda i: (0, 0)),               # ff b2
                pl.BlockSpec((2, D, 3 * D), lambda i: (0, 0, 0)),     # highway_ff W fused (bf16)
                pl.BlockSpec((2, 1, 3 * D), lambda i: (0, 0, 0)),     # highway_ff b
            ],
            out_specs=pl.BlockSpec((tm, D), lambda i: (i, 0)),
        ),
        compiler_params=cparams,
        cost_estimate=row_cost,
    )(x2d, a2d, params["ln"], params["hwa_w"], params["hwa_b"],
      params["ff_w1"], params["ff_b1"], params["ff_w2"], params["ff_b2"],
      params["hwf_w"], params["hwf_b"])

    return out2d[:M].reshape(B, S, D)


# ---------------------------------------------------------------------------
# Parameter init (mirrors nn.Linear U(-1/sqrt(fan_in), +1/sqrt(fan_in)); weights stored
# as (in, out) == torch weight.T; matmul weights cast to bf16; QKV and highway
# gate|non_linear|linear fused along the output dim).
# ---------------------------------------------------------------------------
def init_params(key, d_model, d_ff, heads):
    assert d_model % heads == 0
    ks = jax.random.split(key, 5)
    lim_d = 1.0 / (d_model ** 0.5)
    lim_f = 1.0 / (d_ff ** 0.5)

    def linear(k, fan_in, fan_out, lim):
        kw, kb = jax.random.split(k)
        w = jax.random.uniform(kw, (fan_in, fan_out), jnp.float32, -lim, lim)
        b = jax.random.uniform(kb, (fan_out,), jnp.float32, -lim, lim)
        return w, b

    # attention: q, k, v fused; out separate
    aw, ab = [], []
    for i in range(4):                       # q, k, v, out
        w, b = linear(jax.random.fold_in(ks[0], i), d_model, d_model, lim_d)
        aw.append(w); ab.append(b)
    attn_qkv_w = jnp.concatenate(aw[:3], axis=1).astype(jnp.bfloat16)   # (D, 3D)
    attn_qkv_b = jnp.concatenate(ab[:3])[None, :]                        # (1, 3D)
    attn_out_w = aw[3].astype(jnp.bfloat16)                              # (D, D)
    attn_out_b = ab[3][None, :]                                          # (1, D)

    def highway_params(k):
        Ws, Bs = [], []
        for layer in range(2):
            ws, bs = [], []
            for j in range(3):               # gate, non_linear, linear
                w, b = linear(jax.random.fold_in(k, layer * 3 + j), d_model, d_model, lim_d)
                ws.append(w); bs.append(b)
            Ws.append(jnp.concatenate(ws, axis=1))          # (D, 3D)
            Bs.append(jnp.concatenate(bs)[None, :])         # (1, 3D)
        return jnp.stack(Ws).astype(jnp.bfloat16), jnp.stack(Bs)   # (2,D,3D), (2,1,3D)

    hwa_w, hwa_b = highway_params(ks[1])
    hwf_w, hwf_b = highway_params(ks[2])
    w1, b1 = linear(ks[3], d_model, d_ff, lim_d)
    w2, b2 = linear(ks[4], d_ff, d_model, lim_f)

    ones = jnp.ones((1, d_model), jnp.float32)
    zeros = jnp.zeros((1, d_model), jnp.float32)
    ln = jnp.stack([jnp.stack([ones, zeros]), jnp.stack([ones, zeros])])  # (2, 2, 1, D)

    return dict(attn_qkv_w=attn_qkv_w, attn_qkv_b=attn_qkv_b,
                attn_out_w=attn_out_w, attn_out_b=attn_out_b, ln=ln,
                hwa_w=hwa_w, hwa_b=hwa_b,
                ff_w1=w1.astype(jnp.bfloat16), ff_b1=b1[None, :],
                ff_w2=w2.astype(jnp.bfloat16), ff_b2=b2[None, :],
                hwf_w=hwf_w, hwf_b=hwf_b)


# ---------------------------------------------------------------------------
# Pure-JAX reference (torch math: masked_fill softmax, exact sigmoid/division;
# bf16 MXU operands / f32 accumulation to mirror the compute policy).
# ---------------------------------------------------------------------------
def reference_forward(x, mask, p, *, heads, eps=1e-6):
    B, S, D = x.shape
    dk = D // heads
    f32, bf16 = jnp.float32, jnp.bfloat16

    def mmb(a, w):
        return jnp.dot(a.astype(bf16), w, preferred_element_type=f32)

    wqkv, bqkv = p["attn_qkv_w"], p["attn_qkv_b"]
    q = mmb(x, wqkv[:, 0:D]) + bqkv[:, 0:D]
    k = mmb(x, wqkv[:, D:2 * D]) + bqkv[:, D:2 * D]
    v = mmb(x, wqkv[:, 2 * D:3 * D]) + bqkv[:, 2 * D:3 * D]

    def split(t):
        return t.reshape(B, S, heads, dk).transpose(0, 2, 1, 3)
    qh, kh, vh = split(q), split(k), split(v)
    s = jnp.einsum("bhqd,bhkd->bhqk", qh.astype(bf16), kh.astype(bf16),
                   preferred_element_type=f32)
    mq = mask.astype(f32)[:, None, :, None]             # (B,1,S,1) — masks query rows
    s = jnp.where(mq == 0.0, -1e9, s)
    s = s - jnp.max(s, axis=-1, keepdims=True)
    pr = jnp.exp(s)
    pr = pr / jnp.sum(pr, axis=-1, keepdims=True)
    ctx = jnp.einsum("bhqk,bhkd->bhqd", pr.astype(bf16), vh.astype(bf16),
                     preferred_element_type=f32)
    concat = ctx.transpose(0, 2, 1, 3).reshape(B, S, D)
    attn = mmb(concat, p["attn_out_w"]) + p["attn_out_b"]

    def norm(y, alpha, bias):
        mu = jnp.mean(y, axis=-1, keepdims=True)
        c = y - mu
        var = jnp.sum(c * c, axis=-1, keepdims=True) / (D - 1)
        return alpha * c / (jnp.sqrt(var) + eps) + bias

    def highway(y, W, Bv):
        for l in range(2):
            z = mmb(y, W[l]) + Bv[l]
            g = 1.0 / (1.0 + jnp.exp(-z[..., 0:D]))
            nl = jnp.maximum(z[..., D:2 * D], 0.0)
            lin = z[..., 2 * D:3 * D]
            y = g * nl + (1.0 - g) * lin
        return y

    y = x + attn
    y = norm(y, p["ln"][0, 0], p["ln"][0, 1])
    y = highway(y, p["hwa_w"], p["hwa_b"])
    h = jnp.maximum(mmb(y, p["ff_w1"]) + p["ff_b1"], 0.0)
    f = mmb(h, p["ff_w2"]) + p["ff_b2"]
    y = y + f
    y = norm(y, p["ln"][1, 0], p["ln"][1, 1])
    y = highway(y, p["hwf_w"], p["hwf_b"])
    return y


if __name__ == "__main__":
    key = jax.random.PRNGKey(0)
    kx, kp = jax.random.split(key)

    # Small but lane-dense test shapes (d_model multiple of 128; d_ff = module default 2048).
    batch, seq, d_model, heads = 2, 8, 128, 4
    d_ff = 2048

    x = jax.random.normal(kx, (batch, seq, d_model), jnp.float32)
    mask = jnp.ones((batch, seq), jnp.float32).at[1, -1].set(0.0)
    params = init_params(kp, d_model, d_ff, heads)

    out = encoder_layer_unscaled_highway(x, mask, params, heads=heads)
    out = jax.block_until_ready(out)

    ref = reference_forward(x, mask, params, heads=heads)
    assert out.shape == (batch, seq, d_model)
    err = float(jnp.max(jnp.abs(out - ref)))
    # bf16 operand rounding-order differences + approx EUP reciprocals (softmax denom,
    # layer-norm std, sigmoid) vs the exact-divide reference account for ~1e-2 deviation.
    assert jnp.allclose(out, ref, atol=3e-2, rtol=3e-2), f"max abs err {err}"

    print("KERNEL_OK")
</pallas_src>

<mosaic_0001>
module attributes {stable_mosaic.version = 11 : i64} {
  func.func @_attn_kernel(%arg0: i32, %arg1: memref<1x8x128xf32, #tpu.memory_space<vmem>>, %arg2: memref<1x8x1xf32, #tpu.memory_space<vmem>>, %arg3: memref<128x384xbf16, #tpu.memory_space<vmem>>, %arg4: memref<1x384xf32, #tpu.memory_space<vmem>>, %arg5: memref<128x128xbf16, #tpu.memory_space<vmem>>, %arg6: memref<1x128xf32, #tpu.memory_space<vmem>>, %arg7: memref<1x8x128xbf16, #tpu.memory_space<vmem>>) attributes {dimension_semantics = [#tpu.dimension_semantics<parallel>], iteration_bounds = array<i64: 2>, scalar_prefetch = 0 : i64, scratch_operands = 0 : i64, tpu.core_type = #tpu.core_type<tc>, window_params = [{transform_indices = @transform_0, window_bounds = array<i64: 1, 8, 128>}, {transform_indices = @transform_1, window_bounds = array<i64: 1, 8, 1>}, {pipeline_mode = #tpu.pipeline_mode<synchronous>, transform_indices = @transform_2, window_bounds = array<i64: 128, 384>}, {pipeline_mode = #tpu.pipeline_mode<synchronous>, transform_indices = @transform_3, window_bounds = array<i64: 1, 384>}, {pipeline_mode = #tpu.pipeline_mode<synchronous>, transform_indices = @transform_4, window_bounds = array<i64: 128, 128>}, {pipeline_mode = #tpu.pipeline_mode<synchronous>, transform_indices = @transform_5, window_bounds = array<i64: 1, 128>}, {transform_indices = @transform_6, window_bounds = array<i64: 1, 8, 128>}]} {
    %c0 = arith.constant 0 : index
    %c0_0 = arith.constant 0 : index
    %c0_1 = arith.constant 0 : index
    %0 = vector.load %arg1[%c0, %c0_0, %c0_1] : memref<1x8x128xf32, #tpu.memory_space<vmem>>, vector<1x8x128xf32>
    %1 = vector.shape_cast %0 : vector<1x8x128xf32> to vector<8x128xf32>
    %2 = arith.truncf %1 : vector<8x128xf32> to vector<8x128xbf16>
    %c0_2 = arith.constant 0 : index
    %c0_3 = arith.constant 0 : index
    %3 = vector.load %arg3[%c0_2, %c0_3] : memref<128x384xbf16, #tpu.memory_space<vmem>>, vector<128x384xbf16>
    %cst = arith.constant dense<0.000000e+00> : vector<8x384xf32>
    %4 = tpu.matmul %2, %3, %cst {dimension_numbers = #tpu.dot_dimension_numbers<[1], [0], [0], [1], [0, 0, 1, 1], [], []>} : vector<8x128xbf16>, vector<128x384xbf16>, vector<8x384xf32> -> vector<8x384xf32>
    %c0_4 = arith.constant 0 : index
    %c0_5 = arith.constant 0 : index
    %5 = vector.load %arg4[%c0_4, %c0_5] : memref<1x384xf32, #tpu.memory_space<vmem>>, vector<1x384xf32>
    %6 = vector.broadcast %5 : vector<1x384xf32> to vector<8x384xf32>
    %7 = arith.addf %4, %6 : vector<8x384xf32>
    %c0_6 = arith.constant 0 : index
    %c0_7 = arith.constant 0 : index
    %c0_8 = arith.constant 0 : index
    %8 = vector.load %arg2[%c0_6, %c0_7, %c0_8] : memref<1x8x1xf32, #tpu.memory_space<vmem>>, vector<1x8x1xf32>
    %9 = vector.shape_cast %8 : vector<1x8x1xf32> to vector<8x1xf32>
    %10 = vector.extract_strided_slice %7 {offsets = [0, 0], sizes = [8, 128], strides = [1, 1]} : vector<8x384xf32> to vector<8x128xf32>
    %11 = vector.broadcast %9 : vector<8x1xf32> to vector<8x128xf32>
    %12 = arith.mulf %10, %11 : vector<8x128xf32>
    %13 = vector.extract_strided_slice %7 {offsets = [0, 128], sizes = [8, 128], strides = [1, 1]} : vector<8x384xf32> to vector<8x128xf32>
    %14 = vector.extract_strided_slice %7 {offsets = [0, 256], sizes = [8, 128], strides = [1, 1]} : vector<8x384xf32> to vector<8x128xf32>
    %15 = vector.extract_strided_slice %12 {offsets = [0, 0], sizes = [8, 32], strides = [1, 1]} : vector<8x128xf32> to vector<8x32xf32>
    %16 = arith.truncf %15 : vector<8x32xf32> to vector<8x32xbf16>
    %17 = vector.extract_strided_slice %13 {offsets = [0, 0], sizes = [8, 32], strides = [1, 1]} : vector<8x128xf32> to vector<8x32xf32>
    %18 = arith.truncf %17 : vector<8x32xf32> to vector<8x32xbf16>
    %19 = vector.extract_strided_slice %14 {offsets = [0, 0], sizes = [8, 32], strides = [1, 1]} : vector<8x128xf32> to vector<8x32xf32>
    %20 = arith.truncf %19 : vector<8x32xf32> to vector<8x32xbf16>
    %cst_9 = arith.constant dense<0.000000e+00> : vector<8x8xf32>
    %21 = tpu.matmul %16, %18, %cst_9 {dimension_numbers = #tpu.dot_dimension_numbers<[1], [1], [0], [0], [0, 0, 1, 0], [], []>} : vector<8x32xbf16>, vector<8x32xbf16>, vector<8x8xf32> -> vector<8x8xf32>
    %cst_10 = arith.constant dense<0xFF800000> : vector<8xf32>
    %22 = vector.multi_reduction <maximumf>, %21, %cst_10 [1] : vector<8x8xf32> to vector<8xf32>
    %23 = vector.shape_cast %22 : vector<8xf32> to vector<8x1xf32>
    %24 = vector.broadcast %23 : vector<8x1xf32> to vector<8x8xf32>
    %25 = arith.subf %21, %24 : vector<8x8xf32>
    %26 = math.exp %25 : vector<8x8xf32>
    %cst_11 = arith.constant dense<0.000000e+00> : vector<8xf32>
    %27 = vector.multi_reduction <add>, %26, %cst_11 [1] : vector<8x8xf32> to vector<8xf32>
    %28 = vector.shape_cast %27 : vector<8xf32> to vector<8x1xf32>
    %29 = arith.truncf %26 : vector<8x8xf32> to vector<8x8xbf16>
    %cst_12 = arith.constant dense<0.000000e+00> : vector<8x32xf32>
    %30 = tpu.matmul %29, %20, %cst_12 {dimension_numbers = #tpu.dot_dimension_numbers<[1], [0], [0], [1], [0, 0, 1, 1], [], []>} : vector<8x8xbf16>, vector<8x32xbf16>, vector<8x32xf32> -> vector<8x32xf32>
    %31 = tpu.reciprocal %28 {approx = true} : vector<8x1xf32> -> vector<8x1xf32>
    %32 = vector.broadcast %31 : vector<8x1xf32> to vector<8x32xf32>
    %33 = arith.mulf %30, %32 : vector<8x32xf32>
    %34 = vector.extract_strided_slice %12 {offsets = [0, 32], sizes = [8, 32], strides = [1, 1]} : vector<8x128xf32> to vector<8x32xf32>
    %35 = arith.truncf %34 : vector<8x32xf32> to vector<8x32xbf16>
    %36 = vector.extract_strided_slice %13 {offsets = [0, 32], sizes = [8, 32], strides = [1, 1]} : vector<8x128xf32> to vector<8x32xf32>
    %37 = arith.truncf %36 : vector<8x32xf32> to vector<8x32xbf16>
    %38 = vector.extract_strided_slice %14 {offsets = [0, 32], sizes = [8, 32], strides = [1, 1]} : vector<8x128xf32> to vector<8x32xf32>
    %39 = arith.truncf %38 : vector<8x32xf32> to vector<8x32xbf16>
    %cst_13 = arith.constant dense<0.000000e+00> : vector<8x8xf32>
    %40 = tpu.matmul %35, %37, %cst_13 {dimension_numbers = #tpu.dot_dimension_numbers<[1], [1], [0], [0], [0, 0, 1, 0], [], []>} : vector<8x32xbf16>, vector<8x32xbf16>, vector<8x8xf32> -> vector<8x8xf32>
    %cst_14 = arith.constant dense<0xFF800000> : vector<8xf32>
    %41 = vector.multi_reduction <maximumf>, %40, %cst_14 [1] : vector<8x8xf32> to vector<8xf32>
    %42 = vector.shape_cast %41 : vector<8xf32> to vector<8x1xf32>
    %43 = vector.broadcast %42 : vector<8x1xf32> to vector<8x8xf32>
    %44 = arith.subf %40, %43 : vector<8x8xf32>
    %45 = math.exp %44 : vector<8x8xf32>
    %cst_15 = arith.constant dense<0.000000e+00> : vector<8xf32>
    %46 = vector.multi_reduction <add>, %45, %cst_15 [1] : vector<8x8xf32> to vector<8xf32>
    %47 = vector.shape_cast %46 : vector<8xf32> to vector<8x1xf32>
    %48 = arith.truncf %45 : vector<8x8xf32> to vector<8x8xbf16>
    %cst_16 = arith.constant dense<0.000000e+00> : vector<8x32xf32>
    %49 = tpu.matmul %48, %39, %cst_16 {dimension_numbers = #tpu.dot_dimension_numbers<[1], [0], [0], [1], [0, 0, 1, 1], [], []>} : vector<8x8xbf16>, vector<8x32xbf16>, vector<8x32xf32> -> vector<8x32xf32>
    %50 = tpu.reciprocal %47 {approx = true} : vector<8x1xf32> -> vector<8x1xf32>
    %51 = vector.broadcast %50 : vector<8x1xf32> to vector<8x32xf32>
    %52 = arith.mulf %49, %51 : vector<8x32xf32>
    %53 = vector.extract_strided_slice %12 {offsets = [0, 64], sizes = [8, 32], strides = [1, 1]} : vector<8x128xf32> to vector<8x32xf32>
    %54 = arith.truncf %53 : vector<8x32xf32> to vector<8x32xbf16>
    %55 = vector.extract_strided_slice %13 {offsets = [0, 64], sizes = [8, 32], strides = [1, 1]} : vector<8x128xf32> to vector<8x32xf32>
    %56 = arith.truncf %55 : vector<8x32xf32> to vector<8x32xbf16>
    %57 = vector.extract_strided_slice %14 {offsets = [0, 64], sizes = [8, 32], strides = [1, 1]} : vector<8x128xf32> to vector<8x32xf32>
    %58 = arith.truncf %57 : vector<8x32xf32> to vector<8x32xbf16>
    %cst_17 = arith.constant dense<0.000000e+00> : vector<8x8xf32>
    %59 = tpu.matmul %54, %56, %cst_17 {dimension_numbers = #tpu.dot_dimension_numbers<[1], [1], [0], [0], [0, 0, 1, 0], [], []>} : vector<8x32xbf16>, vector<8x32xbf16>, vector<8x8xf32> -> vector<8x8xf32>
    %cst_18 = arith.constant dense<0xFF800000> : vector<8xf32>
    %60 = vector.multi_reduction <maximumf>, %59, %cst_18 [1] : vector<8x8xf32> to vector<8xf32>
    %61 = vector.shape_cast %60 : vector<8xf32> to vector<8x1xf32>
    %62 = vector.broadcast %61 : vector<8x1xf32> to vector<8x8xf32>
    %63 = arith.subf %59, %62 : vector<8x8xf32>
    %64 = math.exp %63 : vector<8x8xf32>
    %cst_19 = arith.constant dense<0.000000e+00> : vector<8xf32>
    %65 = vector.multi_reduction <add>, %64, %cst_19 [1] : vector<8x8xf32> to vector<8xf32>
    %66 = vector.shape_cast %65 : vector<8xf32> to vector<8x1xf32>
    %67 = arith.truncf %64 : vector<8x8xf32> to vector<8x8xbf16>
    %cst_20 = arith.constant dense<0.000000e+00> : vector<8x32xf32>
    %68 = tpu.matmul %67, %58, %cst_20 {dimension_numbers = #tpu.dot_dimension_numbers<[1], [0], [0], [1], [0, 0, 1, 1], [], []>} : vector<8x8xbf16>, vector<8x32xbf16>, vector<8x32xf32> -> vector<8x32xf32>
    %69 = tpu.reciprocal %66 {approx = true} : vector<8x1xf32> -> vector<8x1xf32>
    %70 = vector.broadcast %69 : vector<8x1xf32> to vector<8x32xf32>
    %71 = arith.mulf %68, %70 : vector<8x32xf32>
    %72 = vector.extract_strided_slice %12 {offsets = [0, 96], sizes = [8, 32], strides = [1, 1]} : vector<8x128xf32> to vector<8x32xf32>
    %73 = arith.truncf %72 : vector<8x32xf32> to vector<8x32xbf16>
    %74 = vector.extract_strided_slice %13 {offsets = [0, 96], sizes = [8, 32], strides = [1, 1]} : vector<8x128xf32> to vector<8x32xf32>
    %75 = arith.truncf %74 : vector<8x32xf32> to vector<8x32xbf16>
    %76 = vector.extract_strided_slice %14 {offsets = [0, 96], sizes = [8, 32], strides = [1, 1]} : vector<8x128xf32> to vector<8x32xf32>
    %77 = arith.truncf %76 : vector<8x32xf32> to vector<8x32xbf16>
    %cst_21 = arith.constant dense<0.000000e+00> : vector<8x8xf32>
    %78 = tpu.matmul %73, %75, %cst_21 {dimension_numbers = #tpu.dot_dimension_numbers<[1], [1], [0], [0], [0, 0, 1, 0], [], []>} : vector<8x32xbf16>, vector<8x32xbf16>, vector<8x8xf32> -> vector<8x8xf32>
    %cst_22 = arith.constant dense<0xFF800000> : vector<8xf32>
    %79 = vector.multi_reduction <maximumf>, %78, %cst_22 [1] : vector<8x8xf32> to vector<8xf32>
    %80 = vector.shape_cast %79 : vector<8xf32> to vector<8x1xf32>
    %81 = vector.broadcast %80 : vector<8x1xf32> to vector<8x8xf32>
    %82 = arith.subf %78, %81 : vector<8x8xf32>
    %83 = math.exp %82 : vector<8x8xf32>
    %cst_23 = arith.constant dense<0.000000e+00> : vector<8xf32>
    %84 = vector.multi_reduction <add>, %83, %cst_23 [1] : vector<8x8xf32> to vector<8xf32>
    %85 = vector.shape_cast %84 : vector<8xf32> to vector<8x1xf32>
    %86 = arith.truncf %83 : vector<8x8xf32> to vector<8x8xbf16>
    %cst_24 = arith.constant dense<0.000000e+00> : vector<8x32xf32>
    %87 = tpu.matmul %86, %77, %cst_24 {dimension_numbers = #tpu.dot_dimension_numbers<[1], [0], [0], [1], [0, 0, 1, 1], [], []>} : vector<8x8xbf16>, vector<8x32xbf16>, vector<8x32xf32> -> vector<8x32xf32>
    %88 = tpu.reciprocal %85 {approx = true} : vector<8x1xf32> -> vector<8x1xf32>
    %89 = vector.broadcast %88 : vector<8x1xf32> to vector<8x32xf32>
    %90 = arith.mulf %87, %89 : vector<8x32xf32>
    %91 = tpu.concatenate %33, %52, %71, %90 in 1 : vector<8x32xf32>, vector<8x32xf32>, vector<8x32xf32>, vector<8x32xf32> -> vector<8x128xf32>
    %92 = arith.truncf %91 : vector<8x128xf32> to vector<8x128xbf16>
    %c0_25 = arith.constant 0 : index
    %c0_26 = arith.constant 0 : index
    %93 = vector.load %arg5[%c0_25, %c0_26] : memref<128x128xbf16, #tpu.memory_space<vmem>>, vector<128x128xbf16>
    %cst_27 = arith.constant dense<0.000000e+00> : vector<8x128xf32>
    %94 = tpu.matmul %92, %93, %cst_27 {dimension_numbers = #tpu.dot_dimension_numbers<[1], [0], [0], [1], [0, 0, 1, 1], [], []>} : vector<8x128xbf16>, vector<128x128xbf16>, vector<8x128xf32> -> vector<8x128xf32>
    %c0_28 = arith.constant 0 : index
    %c0_29 = arith.constant 0 : index
    %95 = vector.load %arg6[%c0_28, %c0_29] : memref<1x128xf32, #tpu.memory_space<vmem>>, vector<1x128xf32>
    %96 = vector.broadcast %95 : vector<1x128xf32> to vector<8x128xf32>
    %97 = arith.addf %94, %96 : vector<8x128xf32>
    %98 = arith.truncf %97 : vector<8x128xf32> to vector<8x128xbf16>
    %c0_30 = arith.constant 0 : index
    %c0_31 = arith.constant 0 : index
    %c0_32 = arith.constant 0 : index
    %99 = vector.load %arg7[%c0_30, %c0_31, %c0_32] : memref<1x8x128xbf16, #tpu.memory_space<vmem>>, vector<1x8x128xbf16>
    %100 = vector.shape_cast %99 : vector<1x8x128xbf16> to vector<8x128xbf16>
    %101 = vector.shape_cast %98 : vector<8x128xbf16> to vector<1x8x128xbf16>
    tpu.vector_store %arg7[%c0_30, %c0_31, %c0_32], %101 {strides = array<i32>} : memref<1x8x128xbf16, #tpu.memory_space<vmem>>, vector<1x8x128xbf16>,
    return
  }
  func.func @transform_0(%arg0: i32) -> (i32, i32, i32) {
    %c0_i32 = arith.constant 0 : i32
    %c0_i32_0 = arith.constant 0 : i32
    %c0_i32_1 = arith.constant 0 : i32
    return %arg0, %c0_i32, %c0_i32_0 : i32, i32, i32
  }
  func.func @transform_1(%arg0: i32) -> (i32, i32, i32) {
    %c0_i32 = arith.constant 0 : i32
    %c0_i32_0 = arith.constant 0 : i32
    %c0_i32_1 = arith.constant 0 : i32
    return %arg0, %c0_i32, %c0_i32_0 : i32, i32, i32
  }
  func.func @transform_2(%arg0: i32) -> (i32, i32) {
    %c0_i32 = arith.constant 0 : i32
    %c0_i32_0 = arith.constant 0 : i32
    %c0_i32_1 = arith.constant 0 : i32
    return %c0_i32, %c0_i32_0 : i32, i32
  }
  func.func @transform_3(%arg0: i32) -> (i32, i32) {
    %c0_i32 = arith.constant 0 : i32
    %c0_i32_0 = arith.constant 0 : i32
    %c0_i32_1 = arith.constant 0 : i32
    return %c0_i32, %c0_i32_0 : i32, i32
  }
  func.func @transform_4(%arg0: i32) -> (i32, i32) {
    %c0_i32 = arith.constant 0 : i32
    %c0_i32_0 = arith.constant 0 : i32
    %c0_i32_1 = arith.constant 0 : i32
    return %c0_i32, %c0_i32_0 : i32, i32
  }
  func.func @transform_5(%arg0: i32) -> (i32, i32) {
    %c0_i32 = arith.constant 0 : i32
    %c0_i32_0 = arith.constant 0 : i32
    %c0_i32_1 = arith.constant 0 : i32
    return %c0_i32, %c0_i32_0 : i32, i32
  }
  func.func @transform_6(%arg0: i32) -> (i32, i32, i32) {
    %c0_i32 = arith.constant 0 : i32
    %c0_i32_0 = arith.constant 0 : i32
    %c0_i32_1 = arith.constant 0 : i32
    return %arg0, %c0_i32, %c0_i32_0 : i32, i32, i32
  }
}

</mosaic_0001>

<llo_original>
// kernel: tpu_custom_call.1
$region0: #{tpu_custom_call.1}
  #allocation0 [shape = 'u32[]', space=smem, size = 0x4, offset = 0x4, fixed_abs, tag = 'smem constant byte address 0x4 - core index']
  #allocation1 [shape = 'u32[144,128]{1,0:T(1,128)}', space=vmem, size = 0x12000, scoped, tag = 'internal scratch']
  %s0 = inlined_call_operand.vmem [shape: f32[2,8,128], index: 0, kind: input, shape index: {}]
  %s1 = inlined_call_operand.vmem [shape: f32[2,8,1], index: 1, kind: input, shape index: {}]
  %s2 = inlined_call_operand.hbm [shape: bf16[128,384], index: 2, kind: input, shape index: {}]
  %s3 = inlined_call_operand.vmem [shape: f32[1,384], index: 3, kind: input, shape index: {}]
  %s4 = inlined_call_operand.hbm [shape: bf16[128,128], index: 4, kind: input, shape index: {}]
  %s5 = inlined_call_operand.vmem [shape: f32[1,128], index: 5, kind: input, shape index: {}]
  %s6 = inlined_call_operand.hbm [shape: bf16[2,8,128], index: 6, kind: output, shape index: {}]
  %s7 = sld [smem:[#allocation0]]
  $region65: #{tpu_custom_call.1} parent=0
    _
  %s9 = ssub.s32 1, %s7
  %s10 = scalar_select 0, %s9, %s7
  $region1: #{tpu_custom_call.1} parent=0
    #allocation2 [shape = 'u8[98304]{0}', space=vmem, size = 0x18000, scoped, tag = 'input window, operand 2, single buffered']
    #allocation3 [shape = 's32[2]{0}', space=sflag, size = 0x8, scoped, tag = 'scoped memory for tpu_custom_call.1']
    #allocation4 [shape = 's32[2]{0}', space=sflag, size = 0x8, scoped, tag = 'scoped memory for tpu_custom_call.1']
    #allocation5 [shape = 'u8[32768]{0}', space=vmem, size = 0x8000, scoped, tag = 'input window, operand 4, single buffered']
    #allocation6 [shape = 's32[1]{0}', space=sflag, size = 0x4, scoped, tag = 'scoped memory for tpu_custom_call.1']
    #allocation7 [shape = 'u8[4096]{0}', space=vmem, size = 0x1000, scoped, tag = 'output window, operand 0']
    %11 = vsyncpa [#allocation3], 0
    %12 = vsyncpa [#allocation6], 0
    %13 = vsyncpa [#allocation4], 0
    %s14 = scalar_lea.sflag [#allocation4], 1
    %15 = vsyncpa %s14, 0
    loop: start=0, step=1, limit=4
    $region2: #{tpu_custom_call.1} parent=1 // loop_pre_header
      _
    $region3: #{tpu_custom_call.1} parent=1 // loop_header
      %s17 = sphi 0, %s21
      %p18 = scmp.ge.s32.totalorder %s17, 4
      %s27 = sphi 0, %s29
      %s30 = sphi 0, %s27
      %s31 = sphi 0, %s30
      %s47 = sphi 0, %s31
      %s53 = sphi 0, %s55
      %s56 = sphi 0, %s53
      %s57 = sphi 0, %s56
      %s73 = sphi 0, %s57
      %s77 = sphi 0, %s77
      %s79 = sphi 0, %s77
      %s80 = sphi 0, %s79
      %s94 = sphi 0, %s80
      %s98 = sphi 0, %s98
      %s100 = sphi 0, %s98
      %s101 = sphi 0, %s100
      %s115 = sphi 0, %s101
      %s119 = sphi 0, %s119
      %s121 = sphi 0, %s119
      %s122 = sphi 0, %s121
      %s136 = sphi 0, %s122
      %s140 = sphi 0, %s140
      %s142 = sphi 0, %s140
      %s143 = sphi 0, %s142
      %s157 = sphi 0, %s143
      %s163 = sphi 0, %s165
      %s166 = sphi 0, %s163
      %s167 = sphi 0, %s166
      %s183 = sphi 0, %s167
    $region4: #{tpu_custom_call.1} parent=1 // loop_header_branch
      %20 = sbr.rel (%p18) target = $region8
    $region5: #{tpu_custom_call.1} parent=1 // loop_body
      %s22 = ssub.s32 %s17, 1
      %s23 = ssub.s32 %s17, 2
      %s24 = sadd.s32 %s17, 1
      %s25 = ssub.s32 %s17, %s24
      %p26 = scmp.eq.s32.totalorder %s25, 0
      %s28 = sadd.s32 %s27, 1
      %s29 = scalar_select %p26, %s27, %s28
      %p32 = pneg %p26
      %p33 = scmp.eq.s32.totalorder %s17, 1
      %p34 = por %p32, %p33
      %p35 = scmp.ne.s32.totalorder %s27, %s30
      %p36 = scmp.eq.s32.totalorder %s17, 0
      %p37 = por %p35, %p36
      %p38 = scmp.ne.s32.totalorder %s27, %s30
      %p39 = scmp.eq.s32.totalorder %s22, 1
      %p40 = por %p38, %p39
      %p41 = scmp.ne.s32.totalorder %s30, %s31
      %p42 = scmp.eq.s32.totalorder %s22, 0
      %p43 = por %p41, %p42
      %p44 = scmp.ne.s32.totalorder %s30, %s31
      %p45 = scmp.eq.s32.totalorder %s23, 1
      %p46 = por %p44, %p45
      %p48 = scmp.ne.s32.totalorder %s31, %s47
      %p49 = scmp.eq.s32.totalorder %s23, 0
      %p50 = por %p48, %p49
      %s51 = ssub.s32 %s17, %s24
      %p52 = scmp.eq.s32.totalorder %s51, 0
      %s54 = sadd.s32 %s53, 1
      %s55 = scalar_select %p52, %s53, %s54
      %p58 = pneg %p52
      %p59 = scmp.eq.s32.totalorder %s17, 1
      %p60 = por %p58, %p59
      %p61 = scmp.ne.s32.totalorder %s53, %s56
      %p62 = scmp.eq.s32.totalorder %s17, 0
      %p63 = por %p61, %p62
      %p64 = scmp.ne.s32.totalorder %s53, %s56
      %p65 = scmp.eq.s32.totalorder %s22, 1
      %p66 = por %p64, %p65
      %p67 = scmp.ne.s32.totalorder %s56, %s57
      %p68 = scmp.eq.s32.totalorder %s22, 0
      %p69 = por %p67, %p68
      %p70 = scmp.ne.s32.totalorder %s56, %s57
      %p71 = scmp.eq.s32.totalorder %s23, 1
      %p72 = por %p70, %p71
      %p74 = scmp.ne.s32.totalorder %s57, %s73
      %p75 = scmp.eq.s32.totalorder %s23, 0
      %p76 = por %p74, %p75
      %s78 = sadd.s32 %s77, 1
      %p81 = scmp.eq.s32.totalorder %s17, 1
      %p82 = scmp.ne.s32.totalorder %s77, %s79
      %p83 = scmp.eq.s32.totalorder %s17, 0
      %p84 = por %p82, %p83
      %p85 = scmp.ne.s32.totalorder %s77, %s79
      %p86 = scmp.eq.s32.totalorder %s22, 1
      %p87 = por %p85, %p86
      %p88 = scmp.ne.s32.totalorder %s79, %s80
      %p89 = scmp.eq.s32.totalorder %s22, 0
      %p90 = por %p88, %p89
      %p91 = scmp.ne.s32.totalorder %s79, %s80
      %p92 = scmp.eq.s32.totalorder %s23, 1
      %p93 = por %p91, %p92
      %p95 = scmp.ne.s32.totalorder %s80, %s94
      %p96 = scmp.eq.s32.totalorder %s23, 0
      %p97 = por %p95, %p96
      %s99 = sadd.s32 %s98, 1
      %p102 = scmp.eq.s32.totalorder %s17, 1
      %p103 = scmp.ne.s32.totalorder %s98, %s100
      %p104 = scmp.eq.s32.totalorder %s17, 0
      %p105 = por %p103, %p104
      %p106 = scmp.ne.s32.totalorder %s98, %s100
      %p107 = scmp.eq.s32.totalorder %s22, 1
      %p108 = por %p106, %p107
      %p109 = scmp.ne.s32.totalorder %s100, %s101
      %p110 = scmp.eq.s32.totalorder %s22, 0
      %p111 = por %p109, %p110
      %p112 = scmp.ne.s32.totalorder %s100, %s101
      %p113 = scmp.eq.s32.totalorder %s23, 1
      %p114 = por %p112, %p113
      %p116 = scmp.ne.s32.totalorder %s101, %s115
      %p117 = scmp.eq.s32.totalorder %s23, 0
      %p118 = por %p116, %p117
      %s120 = sadd.s32 %s119, 1
      %p123 = scmp.eq.s32.totalorder %s17, 1
      %p124 = scmp.ne.s32.totalorder %s119, %s121
      %p125 = scmp.eq.s32.totalorder %s17, 0
      %p126 = por %p124, %p125
      %p127 = scmp.ne.s32.totalorder %s119, %s121
      %p128 = scmp.eq.s32.totalorder %s22, 1
      %p129 = por %p127, %p128
      %p130 = scmp.ne.s32.totalorder %s121, %s122
      %p131 = scmp.eq.s32.totalorder %s22, 0
      %p132 = por %p130, %p131
      %p133 = scmp.ne.s32.totalorder %s121, %s122
      %p134 = scmp.eq.s32.totalorder %s23, 1
      %p135 = por %p133, %p134
      %p137 = scmp.ne.s32.totalorder %s122, %s136
      %p138 = scmp.eq.s32.totalorder %s23, 0
      %p139 = por %p137, %p138
      %s141 = sadd.s32 %s140, 1
      %p144 = scmp.eq.s32.totalorder %s17, 1
      %p145 = scmp.ne.s32.totalorder %s140, %s142
      %p146 = scmp.eq.s32.totalorder %s17, 0
      %p147 = por %p145, %p146
      %p148 = scmp.ne.s32.totalorder %s140, %s142
      %p149 = scmp.eq.s32.totalorder %s22, 1
      %p150 = por %p148, %p149
      %p151 = scmp.ne.s32.totalorder %s142, %s143
      %p152 = scmp.eq.s32.totalorder %s22, 0
      %p153 = por %p151, %p152
      %p154 = scmp.ne.s32.totalorder %s142, %s143
      %p155 = scmp.eq.s32.totalorder %s23, 1
      %p156 = por %p154, %p155
      %p158 = scmp.ne.s32.totalorder %s143, %s157
      %p159 = scmp.eq.s32.totalorder %s23, 0
      %p160 = por %p158, %p159
      %s161 = ssub.s32 %s17, %s24
      %p162 = scmp.eq.s32.totalorder %s161, 0
      %s164 = sadd.s32 %s163, 1
      %s165 = scalar_select %p162, %s163, %s164
      %p168 = pneg %p162
      %p169 = scmp.eq.s32.totalorder %s17, 1
      %p170 = por %p168, %p169
      %p171 = scmp.ne.s32.totalorder %s163, %s166
      %p172 = scmp.eq.s32.totalorder %s17, 0
      %p173 = por %p171, %p172
      %p174 = scmp.ne.s32.totalorder %s163, %s166
      %p175 = scmp.eq.s32.totalorder %s22, 1
      %p176 = por %p174, %p175
      %p177 = scmp.ne.s32.totalorder %s166, %s167
      %p178 = scmp.eq.s32.totalorder %s22, 0
      %p179 = por %p177, %p178
      %p180 = scmp.ne.s32.totalorder %s166, %s167
      %p181 = scmp.eq.s32.totalorder %s23, 1
      %p182 = por %p180, %p181
      %p184 = scmp.ne.s32.totalorder %s167, %s183
      %p185 = scmp.eq.s32.totalorder %s23, 0
      %p186 = por %p184, %p185
      %p187 = scmp.le.s32.totalorder 1, %s17
      %p188 = scmp.lt.s32.totalorder %s17, 3
      %p189 = pnand %p187, %p188
      %p190 = pneg %p189
      // Predicated region
      $region9: #{tpu_custom_call.1} parent=5 // pred_check
        _
      $region10: #{tpu_custom_call.1} parent=5 // pred_check_branch
        %192 = sbr.rel (%p189) target = $region12
      $region11: #{tpu_custom_call.1} parent=5 // pred_region
        %s193 = ssub.s32 %s17, 1
        // Predicated region
        $region13: #{tpu_custom_call.1} parent=11 // pred_check
          %p194 = pneg %p90
        $region14: #{tpu_custom_call.1} parent=11 // pred_check_branch
          %196 = sbr.rel (%p194) target = $region16
        $region15: #{tpu_custom_call.1} parent=11 // pred_region
          %s198 = ssub.s32 3072, 3072
          %199 = vsyncadd [#allocation3], %s198
          %s200 = sshll.u32 [#allocation2], 4
          %s201 = int_to_ptr.vmem [resolvable:$true] %s200
          %206 = dma.hbm_to_vmem [thread:$0]  %s2, 3072, %s201, [#allocation3], 192, 192, 12
        $region16: #{tpu_custom_call.1} parent=11 // pred_fallthru
          _
        // Predicated region
        $region17: #{tpu_custom_call.1} parent=11 // pred_check
          %p207 = pneg %p111
        $region18: #{tpu_custom_call.1} parent=11 // pred_check_branch
          %209 = sbr.rel (%p207) target = $region20
        $region19: #{tpu_custom_call.1} parent=11 // pred_region
          _
        $region20: #{tpu_custom_call.1} parent=11 // pred_fallthru
          _
        // Predicated region
        $region21: #{tpu_custom_call.1} parent=11 // pred_check
          %p210 = pneg %p132
        $region22: #{tpu_custom_call.1} parent=11 // pred_check_branch
          %212 = sbr.rel (%p210) target = $region24
        $region23: #{tpu_custom_call.1} parent=11 // pred_region
          %s214 = ssub.s32 1024, 1024
          %215 = vsyncadd [#allocation6], %s214
          %s216 = sshll.u32 [#allocation5], 4
          %s217 = int_to_ptr.vmem [resolvable:$true] %s216
          %222 = dma.hbm_to_vmem [thread:$0]  %s4, 1024, %s217, [#allocation6], 64, 64, 4
        $region24: #{tpu_custom_call.1} parent=11 // pred_fallthru
          _
        // Predicated region
        $region25: #{tpu_custom_call.1} parent=11 // pred_check
          %p223 = pneg %p153
        $region26: #{tpu_custom_call.1} parent=11 // pred_check_branch
          %225 = sbr.rel (%p223) target = $region28
        $region27: #{tpu_custom_call.1} parent=11 // pred_region
          _
        $region28: #{tpu_custom_call.1} parent=11 // pred_fallthru
          _
      $region12: #{tpu_custom_call.1} parent=5 // pred_fallthru
        _
      %p226 = scmp.lt.s32.totalorder %s17, 2
      // Predicated region
      $region29: #{tpu_custom_call.1} parent=5 // pred_check
        %p227 = pneg %p226
      $region30: #{tpu_custom_call.1} parent=5 // pred_check_branch
        %229 = sbr.rel (%p227) target = $region32
      $region31: #{tpu_custom_call.1} parent=5 // pred_region
        // Predicated region
        $region33: #{tpu_custom_call.1} parent=31 // pred_check
          %p230 = pneg %p37
        $region34: #{tpu_custom_call.1} parent=31 // pred_check_branch
          %232 = sbr.rel (%p230) target = $region36
        $region35: #{tpu_custom_call.1} parent=31 // pred_region
          %p233 = scmp.lt.s32.totalorder %s17, 1
          %s234 = scalar_select %p233, %s17, 1
          %s235 = smul.addr %s234, 8
          %s236 = scalar_lea.vmem %s0, %s235
        $region36: #{tpu_custom_call.1} parent=31 // pred_fallthru
          _
        // Predicated region
        $region37: #{tpu_custom_call.1} parent=31 // pred_check
          %p237 = pneg %p63
        $region38: #{tpu_custom_call.1} parent=31 // pred_check_branch
          %239 = sbr.rel (%p237) target = $region40
        $region39: #{tpu_custom_call.1} parent=31 // pred_region
          %p240 = scmp.lt.s32.totalorder %s17, 1
          %s241 = scalar_select %p240, %s17, 1
          %s242 = smul.addr %s241, 8
          %s243 = scalar_lea.vmem %s1, %s242
        $region40: #{tpu_custom_call.1} parent=31 // pred_fallthru
          _
      $region32: #{tpu_custom_call.1} parent=5 // pred_fallthru
        _
      %p244 = scmp.le.s32.totalorder 1, %s17
      %p245 = scmp.lt.s32.totalorder %s17, 3
      %p246 = pnand %p244, %p245
      %p247 = pneg %p246
      // Predicated region
      $region41: #{tpu_custom_call.1} parent=5 // pred_check
        _
      $region42: #{tpu_custom_call.1} parent=5 // pred_check_branch
        %249 = sbr.rel (%p246) target = $region44
      $region43: #{tpu_custom_call.1} parent=5 // pred_region
        %s250 = ssub.s32 %s17, 1
        // Predicated region
        $region45: #{tpu_custom_call.1} parent=43 // pred_check
          %p251 = pneg %p90
        $region46: #{tpu_custom_call.1} parent=43 // pred_check_branch
          %253 = sbr.rel (%p251) target = $region48
        $region47: #{tpu_custom_call.1} parent=43 // pred_region
          %254 = dma.done [#allocation3], 3072
        $region48: #{tpu_custom_call.1} parent=43 // pred_fallthru
          _
        // Predicated region
        $region49: #{tpu_custom_call.1} parent=43 // pred_check
          %p255 = pneg %p132
        $region50: #{tpu_custom_call.1} parent=43 // pred_check_branch
          %257 = sbr.rel (%p255) target = $region52
        $region51: #{tpu_custom_call.1} parent=43 // pred_region
          %258 = dma.done [#allocation6], 1024
        $region52: #{tpu_custom_call.1} parent=43 // pred_fallthru
          _
        %p259 = scmp.lt.s32.totalorder %s22, 1
        %s260 = scalar_select %p259, %s22, 1
        %s261 = smul.addr %s260, 8
        %s262 = scalar_lea.vmem %s0, %s261
        %p263 = pneg %p43
        %p264 = pneg %p40
        %p265 = scmp.lt.s32.totalorder %s22, 1
        %s266 = scalar_select %p265, %s22, 1
        %s267 = smul.addr %s266, 8
        %s268 = scalar_lea.vmem %s1, %s267
        %p269 = pneg %p69
        %p270 = pneg %p66
        %p271 = pneg %p90
        %p272 = pneg %p87
        %p273 = pneg %p111
        %p274 = pneg %p108
        %p275 = pneg %p132
        %p276 = pneg %p129
        %p277 = pneg %p153
        %p278 = pneg %p150
        %p279 = pneg %p179
        %p280 = pneg %p176
        %s281 = sand.u32 %s166, 1
        %s282 = scalar_lea.sflag [#allocation4], %s281
        %s283 = sand.u32 %s166, 1
        %s284 = smul.addr %s283, 4
        %s285 = scalar_lea.vmem [#allocation7], %s284
        %p286 = scmp.lt.s32.totalorder %s22, 1
        %s287 = scalar_select %p286, %s22, 1
        %s288 = smul.addr %s287, 8
        %s289 = scalar_lea.vmem %s0, %s288
        %p290 = scmp.lt.s32.totalorder %s22, 1
        %s291 = scalar_select %p290, %s22, 1
        %s292 = smul.addr %s291, 8
        %s293 = scalar_lea.vmem %s1, %s292
        %v295 = vld [vmem:[%s289] sm:$0xff]
        %v296 = vpack.c.bf16 %v295, %v295
        %v297 = vld [vmem:[#allocation2] sm:$0xff]
        %v298 = vld [vmem:[#allocation2 + $0x8] sm:$0xf]
        %v299 = vld [vmem:[#allocation2 + $0xc] sm:$0xff]
        %v300 = vld [vmem:[#allocation2 + $0x14] sm:$0xf]
        %v301 = vld [vmem:[#allocation2 + $0x18] sm:$0xff]
        %v302 = vld [vmem:[#allocation2 + $0x20] sm:$0xf]
        %v303 = vld [vmem:[#allocation2 + $0x24] sm:$0xff]
        %v304 = vld [vmem:[#allocation2 + $0x2c] sm:$0xf]
        %v305 = vld [vmem:[#allocation2 + $0x30] sm:$0xff]
        %v306 = vld [vmem:[#allocation2 + $0x38] sm:$0xf]
        %v307 = vld [vmem:[#allocation2 + $0x3c] sm:$0xff]
        %v308 = vld [vmem:[#allocation2 + $0x44] sm:$0xf]
        %v309 = vld [vmem:[#allocation2 + $0x48] sm:$0xff]
        %v310 = vld [vmem:[#allocation2 + $0x50] sm:$0xf]
        %v311 = vld [vmem:[#allocation2 + $0x54] sm:$0xff]
        %v312 = vld [vmem:[#allocation2 + $0x5c] sm:$0xf]
        %v313 = vld [vmem:[#allocation2 + $0x60] sm:$0xff]
        %v314 = vld [vmem:[#allocation2 + $0x68] sm:$0xf]
        %v315 = vld [vmem:[#allocation2 + $0x6c] sm:$0xff]
        %v316 = vld [vmem:[#allocation2 + $0x74] sm:$0xf]
        %v317 = vld [vmem:[#allocation2 + $0x78] sm:$0xff]
        %v318 = vld [vmem:[#allocation2 + $0x80] sm:$0xf]
        %v319 = vld [vmem:[#allocation2 + $0x84] sm:$0xff]
        %v320 = vld [vmem:[#allocation2 + $0x8c] sm:$0xf]
        %v321 = vld [vmem:[#allocation2 + $0x90] sm:$0xff]
        %v322 = vld [vmem:[#allocation2 + $0x98] sm:$0xf]
        %v323 = vld [vmem:[#allocation2 + $0x9c] sm:$0xff]
        %v324 = vld [vmem:[#allocation2 + $0xa4] sm:$0xf]
        %v325 = vld [vmem:[#allocation2 + $0xa8] sm:$0xff]
        %v326 = vld [vmem:[#allocation2 + $0xb0] sm:$0xf]
        %v327 = vld [vmem:[#allocation2 + $0xb4] sm:$0xff]
        %v328 = vld [vmem:[#allocation2 + $0xbc] sm:$0xf]
        %v329 = vld [vmem:[%s3] sm:$0x7]
        %v331 = vlaneseq
        %v332 = vshrl.u32 %v331, 7
        %v333 = vsub.s32 0, %v332
        %v334 = vrot.slane %v329, %v333
        %v335 = vlaneseq
        %v336 = vshrl.u32 %v335, 7
        %v337 = vsub.s32 1, %v336
        %v338 = vrot.slane %v329, %v337
        %v339 = vlaneseq
        %v340 = vshrl.u32 %v339, 7
        %v341 = vsub.s32 2, %v340
        %v342 = vrot.slane %v329, %v341
        %v378 = vunpack.c.l.b16 %v297
        %v379 = vunpack.c.h.b16 %v297
        %v380 = vunpack.c.l.b16 %v298
        %v381 = vunpack.c.l.b16 %v299
        %v382 = vunpack.c.h.b16 %v299
        %v383 = vunpack.c.l.b16 %v300
        %v384 = vunpack.c.l.b16 %v301
        %v385 = vunpack.c.h.b16 %v301
        %v386 = vunpack.c.l.b16 %v302
        %v387 = vunpack.c.l.b16 %v303
        %v388 = vunpack.c.h.b16 %v303
        %v389 = vunpack.c.l.b16 %v304
        %v390 = vunpack.c.l.b16 %v305
        %v391 = vunpack.c.h.b16 %v305
        %v392 = vunpack.c.l.b16 %v306
        %v393 = vunpack.c.l.b16 %v307
        %v394 = vunpack.c.h.b16 %v307
        %v395 = vunpack.c.l.b16 %v308
        %v396 = vunpack.c.l.b16 %v309
        %v397 = vunpack.c.h.b16 %v309
        %v398 = vunpack.c.l.b16 %v310
        %v399 = vunpack.c.l.b16 %v311
        %v400 = vunpack.c.h.b16 %v311
        %v401 = vunpack.c.l.b16 %v312
        %v402 = vunpack.c.l.b16 %v313
        %v403 = vunpack.c.h.b16 %v313
        %v404 = vunpack.c.l.b16 %v314
        %v405 = vunpack.c.l.b16 %v315
        %v406 = vunpack.c.h.b16 %v315
        %v407 = vunpack.c.l.b16 %v316
        %v408 = vunpack.c.l.b16 %v317
        %v409 = vunpack.c.h.b16 %v317
        %v410 = vunpack.c.l.b16 %v318
        %v411 = vunpack.c.l.b16 %v319
        %v412 = vunpack.c.h.b16 %v319
        %v413 = vunpack.c.l.b16 %v320
        %v414 = vunpack.c.l.b16 %v321
        %v415 = vunpack.c.h.b16 %v321
        %v416 = vunpack.c.l.b16 %v322
        %v417 = vunpack.c.l.b16 %v323
        %v418 = vunpack.c.h.b16 %v323
        %v419 = vunpack.c.l.b16 %v324
        %v420 = vunpack.c.l.b16 %v325
        %v421 = vunpack.c.h.b16 %v325
        %v422 = vunpack.c.l.b16 %v326
        %v423 = vunpack.c.l.b16 %v327
        %v424 = vunpack.c.h.b16 %v327
        %v425 = vunpack.c.l.b16 %v328
        %v426 = vpack.c.b16 %v381, %v378
        %v427 = vpack.c.b16 %v382, %v379
        %v428 = vpack.c.b16 %v383, %v380
        %v429 = vpack.c.b16 %v387, %v384
        %v430 = vpack.c.b16 %v388, %v385
        %v431 = vpack.c.b16 %v389, %v386
        %v432 = vpack.c.b16 %v393, %v390
        %v433 = vpack.c.b16 %v394, %v391
        %v434 = vpack.c.b16 %v395, %v392
        %v435 = vpack.c.b16 %v399, %v396
        %v436 = vpack.c.b16 %v400, %v397
        %v437 = vpack.c.b16 %v401, %v398
        %v438 = vpack.c.b16 %v405, %v402
        %v439 = vpack.c.b16 %v406, %v403
        %v440 = vpack.c.b16 %v407, %v404
        %v441 = vpack.c.b16 %v411, %v408
        %v442 = vpack.c.b16 %v412, %v409
        %v443 = vpack.c.b16 %v413, %v410
        %v444 = vpack.c.b16 %v417, %v414
        %v445 = vpack.c.b16 %v418, %v415
        %v446 = vpack.c.b16 %v419, %v416
        %v447 = vpack.c.b16 %v423, %v420
        %v448 = vpack.c.b16 %v424, %v421
        %v449 = vpack.c.b16 %v425, %v422
        %474 = vmatprep.subr.bf16.mxu0 %v448
        %475 = vmatpush1.bf16.msra.mxu0 %v447
        %476 = vmatprep.subr.bf16.mxu0 %v445
        %477 = vmatpush1.bf16.msra.mxu0 %v444
        %478 = vmatprep.subr.bf16.mxu0 %v442
        %479 = vmatpush1.bf16.msra.mxu0 %v441
        %480 = vmatprep.subr.bf16.mxu0 %v439
        %481 = vmatpush1.bf16.msra.mxu0 %v438
        %482 = vmatprep.subr.bf16.mxu0 %v436
        %483 = vmatpush1.bf16.msra.mxu0 %v435
        %484 = vmatprep.subr.bf16.mxu0 %v433
        %485 = vmatpush1.bf16.msra.mxu0 %v432
        %486 = vmatprep.subr.bf16.mxu0 %v430
        %487 = vmatpush1.bf16.msra.mxu0 %v429
        %488 = vmatprep.subr.bf16.mxu0 %v427
        %489 = vmatpush1.bf16.msra.mxu0 %v426
        %490 = vmatprep.subr.bf16.mxu0 0
        %491 = vmatpush2.bf16.msra.mxu0 0
        %492 = vmatprep.subr.bf16.mxu0 0
        %493 = vmatpush2.bf16.msra.mxu0 0
        %494 = vmatprep.subr.bf16.mxu0 0
        %495 = vmatpush2.bf16.msra.mxu0 0
        %496 = vmatprep.subr.bf16.mxu0 0
        %497 = vmatpush2.bf16.msra.mxu0 0
        %498 = vmatprep.subr.bf16.mxu0 0
        %499 = vmatpush2.bf16.msra.mxu0 0
        %500 = vmatprep.subr.bf16.mxu0 0
        %501 = vmatpush2.bf16.msra.mxu0 0
        %502 = vmatprep.subr.bf16.mxu0 0
        %503 = vmatpush2.bf16.msra.mxu0 0
        %504 = vmatprep.subr.bf16.mxu0 0
        %505 = vmatpush2.bf16.msra.mxu0 0
        %506 = vmatprep.mubr.bf16.mxu0 0
        %507 = vmatmul.mubr.bf16.gmra.mxu0 %v296
        %v508 = vpop.f32.mrf.mxu0
        %v509 = vadd.f32 %v334, %v508
        %v510 = vpop.f32.mrf.mxu0
        %v511 = vadd.f32 %v338, %v510
        %v512 = vpop.f32.mrf.mxu0
        %v513 = vpop.f32.mrf.mxu0
        %514 = vdwg.mxu0
        %515 = vmatprep.subr.bf16.mxu0 0
        %516 = vmatpush1.bf16.msra.mxu0 %v449
        %517 = vmatprep.subr.bf16.mxu0 0
        %518 = vmatpush1.bf16.msra.mxu0 %v446
        %519 = vmatprep.subr.bf16.mxu0 0
        %520 = vmatpush1.bf16.msra.mxu0 %v443
        %521 = vmatprep.subr.bf16.mxu0 0
        %522 = vmatpush1.bf16.msra.mxu0 %v440
        %523 = vmatprep.subr.bf16.mxu0 0
        %524 = vmatpush1.bf16.msra.mxu0 %v437
        %525 = vmatprep.subr.bf16.mxu0 0
        %526 = vmatpush1.bf16.msra.mxu0 %v434
        %527 = vmatprep.subr.bf16.mxu0 0
        %528 = vmatpush1.bf16.msra.mxu0 %v431
        %529 = vmatprep.subr.bf16.mxu0 0
        %530 = vmatpush1.bf16.msra.mxu0 %v428
        %531 = vmatprep.subr.bf16.mxu0 0
        %532 = vmatpush2.bf16.msra.mxu0 0
        %533 = vmatprep.subr.bf16.mxu0 0
        %534 = vmatpush2.bf16.msra.mxu0 0
        %535 = vmatprep.subr.bf16.mxu0 0
        %536 = vmatpush2.bf16.msra.mxu0 0
        %537 = vmatprep.subr.bf16.mxu0 0
        %538 = vmatpush2.bf16.msra.mxu0 0
        %539 = vmatprep.subr.bf16.mxu0 0
        %540 = vmatpush2.bf16.msra.mxu0 0
        %541 = vmatprep.subr.bf16.mxu0 0
        %542 = vmatpush2.bf16.msra.mxu0 0
        %543 = vmatprep.subr.bf16.mxu0 0
        %544 = vmatpush2.bf16.msra.mxu0 0
        %545 = vmatprep.subr.bf16.mxu0 0
        %546 = vmatpush2.bf16.msra.mxu0 0
        %547 = vmatprep.mubr.bf16.mxu0 0
        %548 = vmatmul.mubr.bf16.gmra.mxu0 %v296
        %v549 = vpop.f32.mrf.mxu0
        %v550 = vadd.f32 %v342, %v549
        %v551 = vpop.f32.mrf.mxu0
        %v552 = vpop.f32.mrf.mxu0
        %v553 = vpop.f32.mrf.mxu0
        %554 = vdwg.mxu0
        %v555 = vld [vmem:[%s293] sm:$0xff]
        %557 = vset.pattern.permute.xlu0 0
        %558 = vperm.xlu0 %557, %v555
        %v559 = vpop.permute.xlu0 %558
        %v561 = vmul.f32 %v509, %v559
        %v562 = vpack.c.bf16 %v561, %v561
        %v563 = vpack.c.bf16 %v511, %v511
        %v564 = vpack.c.bf16 %v550, %v550
        %vm565 = vcmask 261120
        %v567 = vsel %vm565, %v562, 0
        %v570 = vsel %vm565, %v563, 0
        %572 = vmatprep.subr.bf16.mxu0 0
        %573 = vmatpush1.bf16.xpose.msra.mxu0 0
        %574 = vmatprep.subr.bf16.mxu0 0
        %575 = vmatpush1.bf16.xpose.msra.mxu0 0
        %576 = vmatprep.subr.bf16.mxu0 0
        %577 = vmatpush1.bf16.xpose.msra.mxu0 0
        %578 = vmatprep.subr.bf16.mxu0 0
        %579 = vmatpush1.bf16.xpose.msra.mxu0 0
        %580 = vmatprep.subr.bf16.mxu0 0
        %581 = vmatpush1.bf16.xpose.msra.mxu0 0
        %582 = vmatprep.subr.bf16.mxu0 0
        %583 = vmatpush1.bf16.xpose.msra.mxu0 0
        %584 = vmatprep.subr.bf16.mxu0 0
        %585 = vmatpush1.bf16.xpose.msra.mxu0 0
        %586 = vmatprep.subr.bf16.mxu0 0
        %587 = vmatpush1.bf16.xpose.msra.mxu0 %v570
        %588 = vmatprep.subr.bf16.mxu0 0
        %589 = vmatpush2.bf16.xpose.msra.mxu0 0
        %590 = vmatprep.subr.bf16.mxu0 0
        %591 = vmatpush2.bf16.xpose.msra.mxu0 0
        %592 = vmatprep.subr.bf16.mxu0 0
        %593 = vmatpush2.bf16.xpose.msra.mxu0 0
        %594 = vmatprep.subr.bf16.mxu0 0
        %595 = vmatpush2.bf16.xpose.msra.mxu0 0
        %596 = vmatprep.subr.bf16.mxu0 0
        %597 = vmatpush2.bf16.xpose.msra.mxu0 0
        %598 = vmatprep.subr.bf16.mxu0 0
        %599 = vmatpush2.bf16.xpose.msra.mxu0 0
        %600 = vmatprep.subr.bf16.mxu0 0
        %601 = vmatpush2.bf16.xpose.msra.mxu0 0
        %602 = vmatprep.subr.bf16.mxu0 0
        %603 = vmatpush2.bf16.xpose.msra.mxu0 0
        %604 = vmatprep.mubr.bf16.mxu0 0
        %605 = vmatmul.mubr.bf16.gmra.mxu0 %v567
        %v606 = vpop.f32.mrf.mxu0
        %v607 = vadd.f32 0.0, %v606
        %v608 = vpop.f32.mrf.mxu0
        %v609 = vpop.f32.mrf.mxu0
        %v610 = vpop.f32.mrf.mxu0
        %611 = vdwg.mxu0
        %vm612 = vcmask 64512
        %v613 = vsel %vm612, %v607, -inf
        %614 = vmax.xlane.f32.xlu0 %v613
        %v615 = vpop.xlane.xlu0 %614
        %v616 = vsub.f32 %v607, %v615
        %v617 = vmul.f32 %v616, 1.442695
        %v618 = vpow.pop %v617
        %v619 = vsel %vm612, %v618, 0.0
        %620 = vadd.xlane.f32.xlu0 %v619
        %v621 = vpop.xlane.xlu0 %620
        %v622 = vpack.c.bf16 %v618, %v618
        %v624 = vsel %vm612, %v622, 0
        %vm626 = vcmask 1043456
        %v628 = vsel %vm626, %v564, 0
        %630 = vmatprep.subr.bf16.mxu0 0
        %631 = vmatpush1.bf16.msra.mxu0 0
        %632 = vmatprep.subr.bf16.mxu0 0
        %633 = vmatpush1.bf16.msra.mxu0 0
        %634 = vmatprep.subr.bf16.mxu0 0
        %635 = vmatpush1.bf16.msra.mxu0 0
        %636 = vmatprep.subr.bf16.mxu0 0
        %637 = vmatpush1.bf16.msra.mxu0 0
        %638 = vmatprep.subr.bf16.mxu0 0
        %639 = vmatpush1.bf16.msra.mxu0 0
        %640 = vmatprep.subr.bf16.mxu0 0
        %641 = vmatpush1.bf16.msra.mxu0 0
        %642 = vmatprep.subr.bf16.mxu0 0
        %643 = vmatpush1.bf16.msra.mxu0 0
        %644 = vmatprep.subr.bf16.mxu0 0
        %645 = vmatpush1.bf16.msra.mxu0 %v628
        %646 = vmatprep.subr.bf16.mxu0 0
        %647 = vmatpush2.bf16.msra.mxu0 0
        %648 = vmatprep.subr.bf16.mxu0 0
        %649 = vmatpush2.bf16.msra.mxu0 0
        %650 = vmatprep.subr.bf16.mxu0 0
        %651 = vmatpush2.bf16.msra.mxu0 0
        %652 = vmatprep.subr.bf16.mxu0 0
        %653 = vmatpush2.bf16.msra.mxu0 0
        %654 = vmatprep.subr.bf16.mxu0 0
        %655 = vmatpush2.bf16.msra.mxu0 0
        %656 = vmatprep.subr.bf16.mxu0 0
        %657 = vmatpush2.bf16.msra.mxu0 0
        %658 = vmatprep.subr.bf16.mxu0 0
        %659 = vmatpush2.bf16.msra.mxu0 0
        %660 = vmatprep.subr.bf16.mxu0 0
        %661 = vmatpush2.bf16.msra.mxu0 0
        %662 = vmatprep.mubr.bf16.mxu0 0
        %663 = vmatmul.mubr.bf16.gmra.mxu0 %v624
        %v664 = vpop.f32.mrf.mxu0
        %v665 = vadd.f32 0.0, %v664
        %v666 = vpop.f32.mrf.mxu0
        %v667 = vpop.f32.mrf.mxu0
        %v668 = vpop.f32.mrf.mxu0
        %669 = vdwg.mxu0
        %v670 = vrcp.pop %v621
        %v671 = vmul.f32 %v665, %v670
        %673 = vrot.lane.b32.xlu0 %v562, 96
        %v674 = vpop.permute.xlu0 %673
        %676 = vrot.lane.b32.xlu0 %v563, 96
        %v677 = vpop.permute.xlu0 %676
        %v679 = vsel %vm565, %v674, 0
        %v682 = vsel %vm565, %v677, 0
        %684 = vmatprep.subr.bf16.mxu0 0
        %685 = vmatpush1.bf16.xpose.msra.mxu0 0
        %686 = vmatprep.subr.bf16.mxu0 0
        %687 = vmatpush1.bf16.xpose.msra.mxu0 0
        %688 = vmatprep.subr.bf16.mxu0 0
        %689 = vmatpush1.bf16.xpose.msra.mxu0 0
        %690 = vmatprep.subr.bf16.mxu0 0
        %691 = vmatpush1.bf16.xpose.msra.mxu0 0
        %692 = vmatprep.subr.bf16.mxu0 0
        %693 = vmatpush1.bf16.xpose.msra.mxu0 0
        %694 = vmatprep.subr.bf16.mxu0 0
        %695 = vmatpush1.bf16.xpose.msra.mxu0 0
        %696 = vmatprep.subr.bf16.mxu0 0
        %697 = vmatpush1.bf16.xpose.msra.mxu0 0
        %698 = vmatprep.subr.bf16.mxu0 0
        %699 = vmatpush1.bf16.xpose.msra.mxu0 %v682
        %700 = vmatprep.subr.bf16.mxu0 0
        %701 = vmatpush2.bf16.xpose.msra.mxu0 0
        %702 = vmatprep.subr.bf16.mxu0 0
        %703 = vmatpush2.bf16.xpose.msra.mxu0 0
        %704 = vmatprep.subr.bf16.mxu0 0
        %705 = vmatpush2.bf16.xpose.msra.mxu0 0
        %706 = vmatprep.subr.bf16.mxu0 0
        %707 = vmatpush2.bf16.xpose.msra.mxu0 0
        %708 = vmatprep.subr.bf16.mxu0 0
        %709 = vmatpush2.bf16.xpose.msra.mxu0 0
        %710 = vmatprep.subr.bf16.mxu0 0
        %711 = vmatpush2.bf16.xpose.msra.mxu0 0
        %712 = vmatprep.subr.bf16.mxu0 0
        %713 = vmatpush2.bf16.xpose.msra.mxu0 0
        %714 = vmatprep.subr.bf16.mxu0 0
        %715 = vmatpush2.bf16.xpose.msra.mxu0 0
        %716 = vmatprep.mubr.bf16.mxu0 0
        %717 = vmatmul.mubr.bf16.gmra.mxu0 %v679
        %v718 = vpop.f32.mrf.mxu0
        %v719 = vadd.f32 0.0, %v718
        %v720 = vpop.f32.mrf.mxu0
        %v721 = vpop.f32.mrf.mxu0
        %v722 = vpop.f32.mrf.mxu0
        %723 = vdwg.mxu0
        %v724 = vsel %vm612, %v719, -inf
        %725 = vmax.xlane.f32.xlu0 %v724
        %v726 = vpop.xlane.xlu0 %725
        %v727 = vsub.f32 %v719, %v726
        %v728 = vmul.f32 %v727, 1.442695
        %v729 = vpow.pop %v728
        %v730 = vsel %vm612, %v729, 0.0
        %731 = vadd.xlane.f32.xlu0 %v730
        %v732 = vpop.xlane.xlu0 %731
        %v733 = vpack.c.bf16 %v729, %v729
        %735 = vrot.lane.b32.xlu0 %v564, 96
        %v736 = vpop.permute.xlu0 %735
        %v738 = vsel %vm612, %v733, 0
        %v741 = vsel %vm626, %v736, 0
        %743 = vmatprep.subr.bf16.mxu0 0
        %744 = vmatpush1.bf16.msra.mxu0 0
        %745 = vmatprep.subr.bf16.mxu0 0
        %746 = vmatpush1.bf16.msra.mxu0 0
        %747 = vmatprep.subr.bf16.mxu0 0
        %748 = vmatpush1.bf16.msra.mxu0 0
        %749 = vmatprep.subr.bf16.mxu0 0
        %750 = vmatpush1.bf16.msra.mxu0 0
        %751 = vmatprep.subr.bf16.mxu0 0
        %752 = vmatpush1.bf16.msra.mxu0 0
        %753 = vmatprep.subr.bf16.mxu0 0
        %754 = vmatpush1.bf16.msra.mxu0 0
        %755 = vmatprep.subr.bf16.mxu0 0
        %756 = vmatpush1.bf16.msra.mxu0 0
        %757 = vmatprep.subr.bf16.mxu0 0
        %758 = vmatpush1.bf16.msra.mxu0 %v741
        %759 = vmatprep.subr.bf16.mxu0 0
        %760 = vmatpush2.bf16.msra.mxu0 0
        %761 = vmatprep.subr.bf16.mxu0 0
        %762 = vmatpush2.bf16.msra.mxu0 0
        %763 = vmatprep.subr.bf16.mxu0 0
        %764 = vmatpush2.bf16.msra.mxu0 0
        %765 = vmatprep.subr.bf16.mxu0 0
        %766 = vmatpush2.bf16.msra.mxu0 0
        %767 = vmatprep.subr.bf16.mxu0 0
        %768 = vmatpush2.bf16.msra.mxu0 0
        %769 = vmatprep.subr.bf16.mxu0 0
        %770 = vmatpush2.bf16.msra.mxu0 0
        %771 = vmatprep.subr.bf16.mxu0 0
        %772 = vmatpush2.bf16.msra.mxu0 0
        %773 = vmatprep.subr.bf16.mxu0 0
        %774 = vmatpush2.bf16.msra.mxu0 0
        %775 = vmatprep.mubr.bf16.mxu0 0
        %776 = vmatmul.mubr.bf16.gmra.mxu0 %v738
        %v777 = vpop.f32.mrf.mxu0
        %v778 = vadd.f32 0.0, %v777
        %v779 = vpop.f32.mrf.mxu0
        %v780 = vpop.f32.mrf.mxu0
        %v781 = vpop.f32.mrf.mxu0
        %782 = vdwg.mxu0
        %v783 = vrcp.pop %v732
        %v784 = vmul.f32 %v778, %v783
        %785 = vrot.lane.b32.xlu0 %v562, 64
        %v786 = vpop.permute.xlu0 %785
        %787 = vrot.lane.b32.xlu0 %v563, 64
        %v788 = vpop.permute.xlu0 %787
        %v790 = vsel %vm565, %v786, 0
        %v793 = vsel %vm565, %v788, 0
        %795 = vmatprep.subr.bf16.mxu0 0
        %796 = vmatpush1.bf16.xpose.msra.mxu0 0
        %797 = vmatprep.subr.bf16.mxu0 0
        %798 = vmatpush1.bf16.xpose.msra.mxu0 0
        %799 = vmatprep.subr.bf16.mxu0 0
        %800 = vmatpush1.bf16.xpose.msra.mxu0 0
        %801 = vmatprep.subr.bf16.mxu0 0
        %802 = vmatpush1.bf16.xpose.msra.mxu0 0
        %803 = vmatprep.subr.bf16.mxu0 0
        %804 = vmatpush1.bf16.xpose.msra.mxu0 0
        %805 = vmatprep.subr.bf16.mxu0 0
        %806 = vmatpush1.bf16.xpose.msra.mxu0 0
        %807 = vmatprep.subr.bf16.mxu0 0
        %808 = vmatpush1.bf16.xpose.msra.mxu0 0
        %809 = vmatprep.subr.bf16.mxu0 0
        %810 = vmatpush1.bf16.xpose.msra.mxu0 %v793
        %811 = vmatprep.subr.bf16.mxu0 0
        %812 = vmatpush2.bf16.xpose.msra.mxu0 0
        %813 = vmatprep.subr.bf16.mxu0 0
        %814 = vmatpush2.bf16.xpose.msra.mxu0 0
        %815 = vmatprep.subr.bf16.mxu0 0
        %816 = vmatpush2.bf16.xpose.msra.mxu0 0
        %817 = vmatprep.subr.bf16.mxu0 0
        %818 = vmatpush2.bf16.xpose.msra.mxu0 0
        %819 = vmatprep.subr.bf16.mxu0 0
        %820 = vmatpush2.bf16.xpose.msra.mxu0 0
        %821 = vmatprep.subr.bf16.mxu0 0
        %822 = vmatpush2.bf16.xpose.msra.mxu0 0
        %823 = vmatprep.subr.bf16.mxu0 0
        %824 = vmatpush2.bf16.xpose.msra.mxu0 0
        %825 = vmatprep.subr.bf16.mxu0 0
        %826 = vmatpush2.bf16.xpose.msra.mxu0 0
        %827 = vmatprep.mubr.bf16.mxu0 0
        %828 = vmatmul.mubr.bf16.gmra.mxu0 %v790
        %v829 = vpop.f32.mrf.mxu0
        %v830 = vadd.f32 0.0, %v829
        %v831 = vpop.f32.mrf.mxu0
        %v832 = vpop.f32.mrf.mxu0
        %v833 = vpop.f32.mrf.mxu0
        %834 = vdwg.mxu0
        %v835 = vsel %vm612, %v830, -inf
        %836 = vmax.xlane.f32.xlu0 %v835
        %v837 = vpop.xlane.xlu0 %836
        %v838 = vsub.f32 %v830, %v837
        %v839 = vmul.f32 %v838, 1.442695
        %v840 = vpow.pop %v839
        %v841 = vsel %vm612, %v840, 0.0
        %842 = vadd.xlane.f32.xlu0 %v841
        %v843 = vpop.xlane.xlu0 %842
        %v844 = vpack.c.bf16 %v840, %v840
        %845 = vrot.lane.b32.xlu0 %v564, 64
        %v846 = vpop.permute.xlu0 %845
        %v848 = vsel %vm612, %v844, 0
        %v851 = vsel %vm626, %v846, 0
        %853 = vmatprep.subr.bf16.mxu0 0
        %854 = vmatpush1.bf16.msra.mxu0 0
        %855 = vmatprep.subr.bf16.mxu0 0
        %856 = vmatpush1.bf16.msra.mxu0 0
        %857 = vmatprep.subr.bf16.mxu0 0
        %858 = vmatpush1.bf16.msra.mxu0 0
        %859 = vmatprep.subr.bf16.mxu0 0
        %860 = vmatpush1.bf16.msra.mxu0 0
        %861 = vmatprep.subr.bf16.mxu0 0
        %862 = vmatpush1.bf16.msra.mxu0 0
        %863 = vmatprep.subr.bf16.mxu0 0
        %864 = vmatpush1.bf16.msra.mxu0 0
        %865 = vmatprep.subr.bf16.mxu0 0
        %866 = vmatpush1.bf16.msra.mxu0 0
        %867 = vmatprep.subr.bf16.mxu0 0
        %868 = vmatpush1.bf16.msra.mxu0 %v851
        %869 = vmatprep.subr.bf16.mxu0 0
        %870 = vmatpush2.bf16.msra.mxu0 0
        %871 = vmatprep.subr.bf16.mxu0 0
        %872 = vmatpush2.bf16.msra.mxu0 0
        %873 = vmatprep.subr.bf16.mxu0 0
        %874 = vmatpush2.bf16.msra.mxu0 0
        %875 = vmatprep.subr.bf16.mxu0 0
        %876 = vmatpush2.bf16.msra.mxu0 0
        %877 = vmatprep.subr.bf16.mxu0 0
        %878 = vmatpush2.bf16.msra.mxu0 0
        %879 = vmatprep.subr.bf16.mxu0 0
        %880 = vmatpush2.bf16.msra.mxu0 0
        %881 = vmatprep.subr.bf16.mxu0 0
        %882 = vmatpush2.bf16.msra.mxu0 0
        %883 = vmatprep.subr.bf16.mxu0 0
        %884 = vmatpush2.bf16.msra.mxu0 0
        %885 = vmatprep.mubr.bf16.mxu0 0
        %886 = vmatmul.mubr.bf16.gmra.mxu0 %v848
        %v887 = vpop.f32.mrf.mxu0
        %v888 = vadd.f32 0.0, %v887
        %v889 = vpop.f32.mrf.mxu0
        %v890 = vpop.f32.mrf.mxu0
        %v891 = vpop.f32.mrf.mxu0
        %892 = vdwg.mxu0
        %v893 = vrcp.pop %v843
        %v894 = vmul.f32 %v888, %v893
        %895 = vrot.lane.b32.xlu0 %v562, 32
        %v896 = vpop.permute.xlu0 %895
        %897 = vrot.lane.b32.xlu0 %v563, 32
        %v898 = vpop.permute.xlu0 %897
        %v900 = vsel %vm565, %v896, 0
        %v903 = vsel %vm565, %v898, 0
        %905 = vmatprep.subr.bf16.mxu0 0
        %906 = vmatpush1.bf16.xpose.msra.mxu0 0
        %907 = vmatprep.subr.bf16.mxu0 0
        %908 = vmatpush1.bf16.xpose.msra.mxu0 0
        %909 = vmatprep.subr.bf16.mxu0 0
        %910 = vmatpush1.bf16.xpose.msra.mxu0 0
        %911 = vmatprep.subr.bf16.mxu0 0
        %912 = vmatpush1.bf16.xpose.msra.mxu0 0
        %913 = vmatprep.subr.bf16.mxu0 0
        %914 = vmatpush1.bf16.xpose.msra.mxu0 0
        %915 = vmatprep.subr.bf16.mxu0 0
        %916 = vmatpush1.bf16.xpose.msra.mxu0 0
        %917 = vmatprep.subr.bf16.mxu0 0
        %918 = vmatpush1.bf16.xpose.msra.mxu0 0
        %919 = vmatprep.subr.bf16.mxu0 0
        %920 = vmatpush1.bf16.xpose.msra.mxu0 %v903
        %921 = vmatprep.subr.bf16.mxu0 0
        %922 = vmatpush2.bf16.xpose.msra.mxu0 0
        %923 = vmatprep.subr.bf16.mxu0 0
        %924 = vmatpush2.bf16.xpose.msra.mxu0 0
        %925 = vmatprep.subr.bf16.mxu0 0
        %926 = vmatpush2.bf16.xpose.msra.mxu0 0
        %927 = vmatprep.subr.bf16.mxu0 0
        %928 = vmatpush2.bf16.xpose.msra.mxu0 0
        %929 = vmatprep.subr.bf16.mxu0 0
        %930 = vmatpush2.bf16.xpose.msra.mxu0 0
        %931 = vmatprep.subr.bf16.mxu0 0
        %932 = vmatpush2.bf16.xpose.msra.mxu0 0
        %933 = vmatprep.subr.bf16.mxu0 0
        %934 = vmatpush2.bf16.xpose.msra.mxu0 0
        %935 = vmatprep.subr.bf16.mxu0 0
        %936 = vmatpush2.bf16.xpose.msra.mxu0 0
        %937 = vmatprep.mubr.bf16.mxu0 0
        %938 = vmatmul.mubr.bf16.gmra.mxu0 %v900
        %v939 = vpop.f32.mrf.mxu0
        %v940 = vadd.f32 0.0, %v939
        %v941 = vpop.f32.mrf.mxu0
        %v942 = vpop.f32.mrf.mxu0
        %v943 = vpop.f32.mrf.mxu0
        %944 = vdwg.mxu0
        %v945 = vsel %vm612, %v940, -inf
        %946 = vmax.xlane.f32.xlu0 %v945
        %v947 = vpop.xlane.xlu0 %946
        %v948 = vsub.f32 %v940, %v947
        %v949 = vmul.f32 %v948, 1.442695
        %v950 = vpow.pop %v949
        %v951 = vsel %vm612, %v950, 0.0
        %952 = vadd.xlane.f32.xlu0 %v951
        %v953 = vpop.xlane.xlu0 %952
        %v954 = vpack.c.bf16 %v950, %v950
        %955 = vrot.lane.b32.xlu0 %v564, 32
        %v956 = vpop.permute.xlu0 %955
        %v958 = vsel %vm612, %v954, 0
        %v961 = vsel %vm626, %v956, 0
        %963 = vmatprep.subr.bf16.mxu0 0
        %964 = vmatpush1.bf16.msra.mxu0 0
        %965 = vmatprep.subr.bf16.mxu0 0
        %966 = vmatpush1.bf16.msra.mxu0 0
        %967 = vmatprep.subr.bf16.mxu0 0
        %968 = vmatpush1.bf16.msra.mxu0 0
        %969 = vmatprep.subr.bf16.mxu0 0
        %970 = vmatpush1.bf16.msra.mxu0 0
        %971 = vmatprep.subr.bf16.mxu0 0
        %972 = vmatpush1.bf16.msra.mxu0 0
        %973 = vmatprep.subr.bf16.mxu0 0
        %974 = vmatpush1.bf16.msra.mxu0 0
        %975 = vmatprep.subr.bf16.mxu0 0
        %976 = vmatpush1.bf16.msra.mxu0 0
        %977 = vmatprep.subr.bf16.mxu0 0
        %978 = vmatpush1.bf16.msra.mxu0 %v961
        %979 = vmatprep.subr.bf16.mxu0 0
        %980 = vmatpush2.bf16.msra.mxu0 0
        %981 = vmatprep.subr.bf16.mxu0 0
        %982 = vmatpush2.bf16.msra.mxu0 0
        %983 = vmatprep.subr.bf16.mxu0 0
        %984 = vmatpush2.bf16.msra.mxu0 0
        %985 = vmatprep.subr.bf16.mxu0 0
        %986 = vmatpush2.bf16.msra.mxu0 0
        %987 = vmatprep.subr.bf16.mxu0 0
        %988 = vmatpush2.bf16.msra.mxu0 0
        %989 = vmatprep.subr.bf16.mxu0 0
        %990 = vmatpush2.bf16.msra.mxu0 0
        %991 = vmatprep.subr.bf16.mxu0 0
        %992 = vmatpush2.bf16.msra.mxu0 0
        %993 = vmatprep.subr.bf16.mxu0 0
        %994 = vmatpush2.bf16.msra.mxu0 0
        %995 = vmatprep.mubr.bf16.mxu0 0
        %996 = vmatmul.mubr.bf16.gmra.mxu0 %v958
        %v997 = vpop.f32.mrf.mxu0
        %v998 = vadd.f32 0.0, %v997
        %v999 = vpop.f32.mrf.mxu0
        %v1000 = vpop.f32.mrf.mxu0
        %v1001 = vpop.f32.mrf.mxu0
        %1002 = vdwg.mxu0
        %v1003 = vrcp.pop %v953
        %v1004 = vmul.f32 %v998, %v1003
        %1006 = vrot.lane.b32.xlu0 %v784, 32
        %v1007 = vpop.permute.xlu0 %1006
        %1010 = vrot.lane.b32.xlu0 %v894, 64
        %v1011 = vpop.permute.xlu0 %1010
        %1014 = vrot.lane.b32.xlu0 %v1004, 96
        %v1015 = vpop.permute.xlu0 %1014
        %v1017 = vsel %vm565, %v671, %v1007
        %vm1018 = vcmask 523264
        %v1019 = vsel %vm1018, %v1017, %v1011
        %vm1020 = vcmask 785408
        %v1021 = vsel %vm1020, %v1019, %v1015
        %v1022 = vpack.c.bf16 %v1021, %v1021
        %v1023 = vld [vmem:[#allocation5] sm:$0xf]
        %v1024 = vld [vmem:[#allocation5 + $0x4] sm:$0xf]
        %v1025 = vld [vmem:[#allocation5 + $0x8] sm:$0xf]
        %v1026 = vld [vmem:[#allocation5 + $0xc] sm:$0xf]
        %v1027 = vld [vmem:[#allocation5 + $0x10] sm:$0xf]
        %v1028 = vld [vmem:[#allocation5 + $0x14] sm:$0xf]
        %v1029 = vld [vmem:[#allocation5 + $0x18] sm:$0xf]
        %v1030 = vld [vmem:[#allocation5 + $0x1c] sm:$0xf]
        %v1031 = vld [vmem:[#allocation5 + $0x20] sm:$0xf]
        %v1032 = vld [vmem:[#allocation5 + $0x24] sm:$0xf]
        %v1033 = vld [vmem:[#allocation5 + $0x28] sm:$0xf]
        %v1034 = vld [vmem:[#allocation5 + $0x2c] sm:$0xf]
        %v1035 = vld [vmem:[#allocation5 + $0x30] sm:$0xf]
        %v1036 = vld [vmem:[#allocation5 + $0x34] sm:$0xf]
        %v1037 = vld [vmem:[#allocation5 + $0x38] sm:$0xf]
        %v1038 = vld [vmem:[#allocation5 + $0x3c] sm:$0xf]
        %v1039 = vld [vmem:[%s5] sm:$0x1]
        %v1041 = vlaneseq
        %v1042 = vshrl.u32 %v1041, 7
        %v1043 = vsub.s32 0, %v1042
        %v1044 = vrot.slane %v1039, %v1043
        %v1062 = vunpack.c.l.b16 %v1023
        %v1063 = vunpack.c.l.b16 %v1024
        %v1064 = vunpack.c.l.b16 %v1025
        %v1065 = vunpack.c.l.b16 %v1026
        %v1066 = vunpack.c.l.b16 %v1027
        %v1067 = vunpack.c.l.b16 %v1028
        %v1068 = vunpack.c.l.b16 %v1029
        %v1069 = vunpack.c.l.b16 %v1030
        %v1070 = vunpack.c.l.b16 %v1031
        %v1071 = vunpack.c.l.b16 %v1032
        %v1072 = vunpack.c.l.b16 %v1033
        %v1073 = vunpack.c.l.b16 %v1034
        %v1074 = vunpack.c.l.b16 %v1035
        %v1075 = vunpack.c.l.b16 %v1036
        %v1076 = vunpack.c.l.b16 %v1037
        %v1077 = vunpack.c.l.b16 %v1038
        %v1078 = vpack.c.b16 %v1063, %v1062
        %v1079 = vpack.c.b16 %v1065, %v1064
        %v1080 = vpack.c.b16 %v1067, %v1066
        %v1081 = vpack.c.b16 %v1069, %v1068
        %v1082 = vpack.c.b16 %v1071, %v1070
        %v1083 = vpack.c.b16 %v1073, %v1072
        %v1084 = vpack.c.b16 %v1075, %v1074
        %v1085 = vpack.c.b16 %v1077, %v1076
        %1094 = vmatprep.subr.bf16.mxu0 0
        %1095 = vmatpush1.bf16.msra.mxu0 %v1085
        %1096 = vmatprep.subr.bf16.mxu0 0
        %1097 = vmatpush1.bf16.msra.mxu0 %v1084
        %1098 = vmatprep.subr.bf16.mxu0 0
        %1099 = vmatpush1.bf16.msra.mxu0 %v1083
        %1100 = vmatprep.subr.bf16.mxu0 0
        %1101 = vmatpush1.bf16.msra.mxu0 %v1082
        %1102 = vmatprep.subr.bf16.mxu0 0
        %1103 = vmatpush1.bf16.msra.mxu0 %v1081
        %1104 = vmatprep.subr.bf16.mxu0 0
        %1105 = vmatpush1.bf16.msra.mxu0 %v1080
        %1106 = vmatprep.subr.bf16.mxu0 0
        %1107 = vmatpush1.bf16.msra.mxu0 %v1079
        %1108 = vmatprep.subr.bf16.mxu0 0
        %1109 = vmatpush1.bf16.msra.mxu0 %v1078
        %1110 = vmatprep.subr.bf16.mxu0 0
        %1111 = vmatpush2.bf16.msra.mxu0 0
        %1112 = vmatprep.subr.bf16.mxu0 0
        %1113 = vmatpush2.bf16.msra.mxu0 0
        %1114 = vmatprep.subr.bf16.mxu0 0
        %1115 = vmatpush2.bf16.msra.mxu0 0
        %1116 = vmatprep.subr.bf16.mxu0 0
        %1117 = vmatpush2.bf16.msra.mxu0 0
        %1118 = vmatprep.subr.bf16.mxu0 0
        %1119 = vmatpush2.bf16.msra.mxu0 0
        %1120 = vmatprep.subr.bf16.mxu0 0
        %1121 = vmatpush2.bf16.msra.mxu0 0
        %1122 = vmatprep.subr.bf16.mxu0 0
        %1123 = vmatpush2.bf16.msra.mxu0 0
        %1124 = vmatprep.subr.bf16.mxu0 0
        %1125 = vmatpush2.bf16.msra.mxu0 0
        %1126 = vmatprep.mubr.bf16.mxu0 0
        %1127 = vmatmul.mubr.bf16.gmra.mxu0 %v1022
        %v1128 = vpop.f32.mrf.mxu0
        %v1129 = vadd.f32 %v1044, %v1128
        %v1130 = vpop.f32.mrf.mxu0
        %v1131 = vpop.f32.mrf.mxu0
        %v1132 = vpop.f32.mrf.mxu0
        %1133 = vdwg.mxu0
        %v1134 = vpack.c.bf16 %v1129, %v1129
        %1135 = vst [vmem:[%s285] sm:$0xf] %v1134
        %s1136 = sand.u32 %s166, 1
        %s1137 = scalar_lea.sflag [#allocation4], %s1136
        %s1138 = sand.u32 %s166, 1
        %s1139 = smul.addr %s1138, 4
        %s1140 = scalar_lea.vmem [#allocation7], %s1139
        // Predicated region
        $region53: #{tpu_custom_call.1} parent=43 // pred_check
          %p1141 = pneg %p176
        $region54: #{tpu_custom_call.1} parent=43 // pred_check_branch
          %1143 = sbr.rel (%p1141) target = $region56
        $region55: #{tpu_custom_call.1} parent=43 // pred_region
          %s1145 = ssub.s32 64, 64
          %1146 = vsyncadd %s1137, %s1145
          %s1147 = smul.addr %s22, 64
          %s1148 = scalar_lea.hbm %s6, %s1147
          %s1150 = sshll.u32 %s1140, 4
          %s1151 = int_to_ptr.vmem [resolvable:$true] %s1150
          %1153 = dma.vmem_to_hbm [thread:$0]  %s1151, 64, %s1148, %s1137
        $region56: #{tpu_custom_call.1} parent=43 // pred_fallthru
          _
      $region44: #{tpu_custom_call.1} parent=5 // pred_fallthru
        _
      %p1154 = scmp.le.s32.totalorder 2, %s17
      // Predicated region
      $region57: #{tpu_custom_call.1} parent=5 // pred_check
        %p1155 = pneg %p1154
      $region58: #{tpu_custom_call.1} parent=5 // pred_check_branch
        %1157 = sbr.rel (%p1155) target = $region60
      $region59: #{tpu_custom_call.1} parent=5 // pred_region
        %s1158 = ssub.s32 %s17, 2
        // Predicated region
        $region61: #{tpu_custom_call.1} parent=59 // pred_check
          %p1159 = pneg %p182
        $region62: #{tpu_custom_call.1} parent=59 // pred_check_branch
          %1161 = sbr.rel (%p1159) target = $region64
        $region63: #{tpu_custom_call.1} parent=59 // pred_region
          %s1162 = sand.u32 %s167, 1
          %s1163 = scalar_lea.sflag [#allocation4], %s1162
          %s1164 = sand.u32 %s167, 1
          %s1165 = smul.addr %s1164, 4
          %s1166 = scalar_lea.vmem [#allocation7], %s1165
          %1167 = dma.done %s1163, 64
        $region64: #{tpu_custom_call.1} parent=59 // pred_fallthru
          _
      $region60: #{tpu_custom_call.1} parent=5 // pred_fallthru
        _
    $region6: #{tpu_custom_call.1} parent=1 // loop_footer
      %s21 = sadd.s32 1, %s17
    $region7: #{tpu_custom_call.1} parent=1 // loop_footer_branch
      %16 = sbr.rel target = $region3
    $region8: #{tpu_custom_call.1} parent=1 // loop_exit
      _
    %1168 = vsyncpa [#allocation3], 1
    %s1169 = scalar_lea.sflag [#allocation3], 1
    %1170 = vsyncpa %s1169, 1
    %1171 = vsyncpa [#allocation6], 1
    %1172 = vsyncpa [#allocation4], 1
    %s1173 = scalar_lea.sflag [#allocation4], 1
    %1174 = vsyncpa %s1173, 1

</llo_original>
